<compile_context>
chip_gen: v7x
topology: tpu7x:2x2x1
jax: 0.10.0
libtpu: 0.0.40
codegen_flags: <defaults>
</compile_context>

<pallas_src>
import math

import jax
import jax.numpy as jnp
from jax.experimental import pallas as pl
from jax.experimental.pallas import tpu as pltpu


def _linear_kernel(x_ref, w_ref, scale_ref, b_ref, o_ref):
    # x_ref: (M, K) f32   w_ref: (K, tn) int8|bf16|f32
    # scale_ref, b_ref: (1, tn) f32    o_ref: (M, tn) f32
    w = w_ref[...]
    if jnp.issubdtype(w.dtype, jnp.integer):
        # int8 codes are exactly representable in bf16 -> no extra error.
        w = w.astype(jnp.bfloat16)
    x = x_ref[...].astype(w.dtype)                       # in-kernel cast (VPU)
    acc = jnp.dot(x, w, preferred_element_type=jnp.float32)   # MXU, f32 acc
    # Per-output-column dequant scale + bias, fused (hidden under weight DMA).
    o_ref[...] = acc * scale_ref[...] + b_ref[...]


def _is_single_tensorcore_chip():
    """True for v5e / v6e (one TensorCore per chip); default False (v7x/v4/v5p
    benefit from >= 2 parallel blocks, and 2 blocks is a safe default)."""
    try:
        kind = jax.devices()[0].device_kind.lower()
    except Exception:
        return False
    return any(t in kind for t in
               ("v5e", "v5 lite", "v5lite", "v6e", "v6 lite", "v6lite", "trillium"))


def _pick_tn(n, *, min_blocks):
    """Largest lane-aligned (multiple of 128) tile dividing n with at least
    `min_blocks` blocks; otherwise a single full-extent block (always legal)."""
    if min_blocks <= 1 or n % 128 != 0 or (n // 128) < min_blocks:
        return n
    lanes = n // 128
    for blocks in range(min_blocks, lanes + 1):
        if lanes % blocks == 0:
            return (lanes // blocks) * 128
    return n


def pallas_linear(x_flat, w_q, scale, b, *, tn=None):
    """x_flat: (M, K) f32, w_q: (K, N) int8/bf16/f32, scale/b: (1, N) f32.
    Returns (M, N) f32 = (x @ dequant(w_q)) + b."""
    M, K = x_flat.shape
    Kw, N = w_q.shape
    assert K == Kw and scale.shape == (1, N) and b.shape == (1, N)

    if tn is None:
        min_blocks = 1 if _is_single_tensorcore_chip() else 2
        tn = _pick_tn(N, min_blocks=min_blocks)
    assert N % tn == 0

    w_elt = jnp.dtype(w_q.dtype).itemsize
    cost = pl.CostEstimate(
        flops=2 * M * K * N,
        transcendentals=0,
        bytes_accessed=M * K * 4 + K * N * w_elt + 2 * N * 4 + M * N * 4,
    )

    return pl.pallas_call(
        _linear_kernel,
        out_shape=jax.ShapeDtypeStruct((M, N), jnp.float32),
        grid_spec=pltpu.PrefetchScalarGridSpec(
            num_scalar_prefetch=0,
            grid=(N // tn,),
            in_specs=[
                # x fully resident: same (M, K) block every grid step.
                pl.BlockSpec((M, K), lambda j: (0, 0)),
                # One full-K column stripe of the weight per step.
                pl.BlockSpec((K, tn), lambda j: (0, j)),
                # Per-output-column scale and bias stripes.
                pl.BlockSpec((1, tn), lambda j: (0, j)),
                pl.BlockSpec((1, tn), lambda j: (0, j)),
            ],
            out_specs=pl.BlockSpec((M, tn), lambda j: (0, j)),
        ),
        compiler_params=pltpu.CompilerParams(
            dimension_semantics=("parallel",),
        ),
        cost_estimate=cost,
    )(x_flat, w_q, scale, b)


class ImgGenPallas:
    """JAX/Pallas equivalent of the PyTorch ImgGen module."""

    def __init__(self, shape=(3, 32, 32), seed_shape=(3, 16, 16), key=None,
                 quantize=True, weight_dtype=jnp.bfloat16):
        if key is None:
            key = jax.random.PRNGKey(0)
        k_seed, k_w, k_b = jax.random.split(key, 3)

        self.output_shape = shape
        self.seed_shape = seed_shape
        in_features = math.prod(seed_shape)
        out_features = math.prod(shape)

        # seed ~ N(0, 1), like torch.randn
        self.seed = jax.random.normal(k_seed, seed_shape, dtype=jnp.float32)
        # weight.data.uniform_(-0.01, 0.03)
        w = jax.random.uniform(
            k_w, (out_features, in_features), dtype=jnp.float32,
            minval=-0.01, maxval=0.03,
        )
        # bias: torch Linear default U(-1/sqrt(fan_in), 1/sqrt(fan_in))
        bound = 1.0 / (in_features ** 0.5)
        b = jax.random.uniform(
            k_b, (out_features,), dtype=jnp.float32,
            minval=-bound, maxval=bound,
        )

        # Transpose once so the kernel streams (K, N) column stripes.
        w_t = jnp.transpose(w)                              # (K, N) f32
        self.w_f32 = w_t                                    # kept for self-test only
        self.b = b.reshape(1, out_features)                 # (1, N) f32, stays f32

        if quantize:
            # Weight-only int8 with per-output-column scale (symmetric).
            amax = jnp.max(jnp.abs(w_t), axis=0, keepdims=True)          # (1, N)
            self.scale = jnp.maximum(amax, 1e-8) / 127.0                 # (1, N) f32
            self.w_q = jnp.clip(jnp.round(w_t / self.scale),
                                -127, 127).astype(jnp.int8)              # (K, N) i8
        else:
            self.scale = jnp.ones((1, out_features), dtype=jnp.float32)
            self.w_q = w_t.astype(weight_dtype)

    def __call__(self, x):
        # Matches the PyTorch forward: flatten regardless of rank, linear,
        # reshape.  No wrapper-side cast: dtype handling is inside the kernel.
        x_flat = jnp.reshape(x, (1, -1))
        y = pallas_linear(x_flat, self.w_q, self.scale, self.b)   # (1, N) f32
        return jnp.reshape(y, self.output_shape)

    def sample(self):
        return self(self.seed)


if __name__ == "__main__":
    key = jax.random.PRNGKey(0)
    # Small shapes consistent with the module: seed (3,16,16) -> output (3,32,32)
    model = ImgGenPallas(shape=(3, 32, 32), seed_shape=(3, 16, 16), key=key)

    x = jax.random.normal(jax.random.PRNGKey(1), (3, 16, 16), dtype=jnp.float32)

    out = jax.block_until_ready(model(x))
    assert out.shape == (3, 32, 32)

    # --- Kernel-correctness reference: identical math (bf16 x, exact int8
    #     codes, post-dot scale + bias) in plain JAX.
    xf = jnp.reshape(x, (1, -1)).astype(jnp.bfloat16).astype(jnp.float32)
    codes = model.w_q.astype(jnp.float32)                          # (K, N)
    ref = ((xf @ codes) * model.scale + model.b).reshape(3, 32, 32)
    assert jnp.allclose(out, ref, atol=1e-3, rtol=1e-3), "kernel != dequant reference"

    # --- Quantization fidelity vs. the true f32 weights (coarse, L2-relative).
    ref_f32 = (jnp.dot(jnp.reshape(x, (1, -1)), model.w_f32,
                       precision=jax.lax.Precision.HIGHEST)
               + model.b).reshape(3, 32, 32)
    rel = jnp.linalg.norm(out - ref_f32) / jnp.linalg.norm(ref_f32)
    assert float(rel) < 2e-2, f"weight-only int8 error too large: {float(rel)}"

    # --- 1-D input path and sample()
    out1d = jax.block_until_ready(model(jnp.reshape(x, (-1,))))
    assert out1d.shape == (3, 32, 32)
    assert jnp.allclose(out1d, ref, atol=1e-3, rtol=1e-3)
    s = jax.block_until_ready(model.sample())
    assert s.shape == (3, 32, 32)

    # --- Batched (M, K) path: weight stream amortized over M rows in one call.
    xb = jnp.stack([jnp.reshape(x, (-1,)), jnp.reshape(model.seed, (-1,))])  # (2, K)
    yb = jax.block_until_ready(pallas_linear(xb, model.w_q, model.scale, model.b))
    xb16 = xb.astype(jnp.bfloat16).astype(jnp.float32)
    refb = (xb16 @ codes) * model.scale + model.b
    assert jnp.allclose(yb, refb, atol=1e-3, rtol=1e-3)

    print("KERNEL_OK")
</pallas_src>

<mosaic_0001>
module attributes {stable_mosaic.version = 11 : i64} {
  func.func @_linear_kernel(%arg0: i32, %arg1: memref<1x768xf32, #tpu.memory_space<vmem>>, %arg2: memref<768x1536xi8, #tpu.memory_space<vmem>>, %arg3: memref<1x1536xf32, #tpu.memory_space<vmem>>, %arg4: memref<1x1536xf32, #tpu.memory_space<vmem>>, %arg5: memref<1x1536xf32, #tpu.memory_space<vmem>>) attributes {dimension_semantics = [#tpu.dimension_semantics<parallel>], iteration_bounds = array<i64: 2>, scalar_prefetch = 0 : i64, scratch_operands = 0 : i64, tpu.core_type = #tpu.core_type<tc>, window_params = [{pipeline_mode = #tpu.pipeline_mode<synchronous>, transform_indices = @transform_0, window_bounds = array<i64: 1, 768>}, {transform_indices = @transform_1, window_bounds = array<i64: 768, 1536>}, {transform_indices = @transform_2, window_bounds = array<i64: 1, 1536>}, {transform_indices = @transform_3, window_bounds = array<i64: 1, 1536>}, {transform_indices = @transform_4, window_bounds = array<i64: 1, 1536>}]} {
    %c0 = arith.constant 0 : index
    %c0_0 = arith.constant 0 : index
    %0 = vector.load %arg2[%c0, %c0_0] : memref<768x1536xi8, #tpu.memory_space<vmem>>, vector<768x1536xi8>
    %1 = arith.sitofp %0 : vector<768x1536xi8> to vector<768x1536xbf16>
    %c0_1 = arith.constant 0 : index
    %c0_2 = arith.constant 0 : index
    %2 = vector.load %arg1[%c0_1, %c0_2] : memref<1x768xf32, #tpu.memory_space<vmem>>, vector<1x768xf32>
    %3 = arith.truncf %2 : vector<1x768xf32> to vector<1x768xbf16>
    %cst = arith.constant dense<0.000000e+00> : vector<1x1536xf32>
    %4 = tpu.matmul %3, %1, %cst {dimension_numbers = #tpu.dot_dimension_numbers<[1], [0], [0], [1], [0, 0, 1, 1], [], []>} : vector<1x768xbf16>, vector<768x1536xbf16>, vector<1x1536xf32> -> vector<1x1536xf32>
    %c0_3 = arith.constant 0 : index
    %c0_4 = arith.constant 0 : index
    %5 = vector.load %arg3[%c0_3, %c0_4] : memref<1x1536xf32, #tpu.memory_space<vmem>>, vector<1x1536xf32>
    %6 = arith.mulf %4, %5 : vector<1x1536xf32>
    %c0_5 = arith.constant 0 : index
    %c0_6 = arith.constant 0 : index
    %7 = vector.load %arg4[%c0_5, %c0_6] : memref<1x1536xf32, #tpu.memory_space<vmem>>, vector<1x1536xf32>
    %8 = arith.addf %6, %7 : vector<1x1536xf32>
    %c0_7 = arith.constant 0 : index
    %c0_8 = arith.constant 0 : index
    %9 = vector.load %arg5[%c0_7, %c0_8] : memref<1x1536xf32, #tpu.memory_space<vmem>>, vector<1x1536xf32>
    tpu.vector_store %arg5[%c0_7, %c0_8], %8 {strides = array<i32>} : memref<1x1536xf32, #tpu.memory_space<vmem>>, vector<1x1536xf32>,
    return
  }
  func.func @transform_0(%arg0: i32) -> (i32, i32) {
    %c0_i32 = arith.constant 0 : i32
    %c0_i32_0 = arith.constant 0 : i32
    %c0_i32_1 = arith.constant 0 : i32
    return %c0_i32, %c0_i32_0 : i32, i32
  }
  func.func @transform_1(%arg0: i32) -> (i32, i32) {
    %c0_i32 = arith.constant 0 : i32
    %c0_i32_0 = arith.constant 0 : i32
    return %c0_i32, %arg0 : i32, i32
  }
  func.func @transform_2(%arg0: i32) -> (i32, i32) {
    %c0_i32 = arith.constant 0 : i32
    %c0_i32_0 = arith.constant 0 : i32
    return %c0_i32, %arg0 : i32, i32
  }
  func.func @transform_3(%arg0: i32) -> (i32, i32) {
    %c0_i32 = arith.constant 0 : i32
    %c0_i32_0 = arith.constant 0 : i32
    return %c0_i32, %arg0 : i32, i32
  }
  func.func @transform_4(%arg0: i32) -> (i32, i32) {
    %c0_i32 = arith.constant 0 : i32
    %c0_i32_0 = arith.constant 0 : i32
    return %c0_i32, %arg0 : i32, i32
  }
}

</mosaic_0001>

<llo_original>
// kernel: tpu_custom_call.1
$region0: #{tpu_custom_call.1}
  #allocation0 [shape = 'u32[]', space=smem, size = 0x4, offset = 0x4, fixed_abs, tag = 'smem constant byte address 0x4 - core index']
  #allocation1 [shape = 'u32[144,128]{1,0:T(1,128)}', space=vmem, size = 0x12000, scoped, tag = 'internal scratch']
  %s0 = inlined_call_operand.hbm [shape: f32[1,768], index: 0, kind: input, shape index: {}]
  %s1 = inlined_call_operand.hbm [shape: s8[768,3072], index: 1, kind: input, shape index: {}]
  %s2 = inlined_call_operand.hbm [shape: f32[1,3072], index: 2, kind: input, shape index: {}]
  %s3 = inlined_call_operand.hbm [shape: f32[1,3072], index: 3, kind: input, shape index: {}]
  %s4 = inlined_call_operand.hbm [shape: f32[1,3072], index: 4, kind: output, shape index: {}]
  %s5 = sld [smem:[#allocation0]]
  $region65: #{tpu_custom_call.1} parent=0
    _
  %s7 = ssub.s32 1, %s5
  %s8 = scalar_select 0, %s7, %s5
  $region1: #{tpu_custom_call.1} parent=0
    #allocation2 [shape = 'u8[3072]{0}', space=vmem, size = 0xc00, scoped, tag = 'input window, operand 0, single buffered']
    #allocation3 [shape = 's32[2]{0}', space=sflag, size = 0x8, scoped, tag = 'scoped memory for tpu_custom_call.1']
    #allocation4 [shape = 's32[2]{0}', space=sflag, size = 0x8, scoped, tag = 'scoped memory for tpu_custom_call.1']
    #allocation5 [shape = 'u8[2359296]{0}', space=vmem, size = 0x240000, scoped, tag = 'input window, operand 1']
    #allocation6 [shape = 's32[2]{0}', space=sflag, size = 0x8, scoped, tag = 'scoped memory for tpu_custom_call.1']
    #allocation7 [shape = 'u8[12288]{0}', space=vmem, size = 0x3000, scoped, tag = 'input window, operand 2']
    #allocation8 [shape = 'u8[12288]{0}', space=vmem, size = 0x3000, scoped, tag = 'input window, operand 3']
    #allocation9 [shape = 's32[2]{0}', space=sflag, size = 0x8, scoped, tag = 'scoped memory for tpu_custom_call.1']
    #allocation10 [shape = 'u8[12288]{0}', space=vmem, size = 0x3000, scoped, tag = 'output window, operand 0']
    %9 = vsyncpa [#allocation3], 0
    %10 = vsyncpa [#allocation6], 0
    %s11 = scalar_lea.sflag [#allocation6], 1
    %12 = vsyncpa %s11, 0
    %13 = vsyncpa [#allocation9], 0
    %s14 = scalar_lea.sflag [#allocation9], 1
    %15 = vsyncpa %s14, 0
    %16 = vsyncpa [#allocation4], 0
    %s17 = scalar_lea.sflag [#allocation4], 1
    %18 = vsyncpa %s17, 0
    loop: start=0, step=1, limit=4
    $region2: #{tpu_custom_call.1} parent=1 // loop_pre_header
      _
    $region3: #{tpu_custom_call.1} parent=1 // loop_header
      %s20 = sphi 0, %s24
      %p21 = scmp.ge.s32.totalorder %s20, 4
      %s28 = sphi 0, %s28
      %s30 = sphi 0, %s28
      %s31 = sphi 0, %s30
      %s45 = sphi 0, %s31
      %s51 = sphi 0, %s53
      %s54 = sphi 0, %s51
      %s55 = sphi 0, %s54
      %s71 = sphi 0, %s55
      %s77 = sphi 0, %s79
      %s80 = sphi 0, %s77
      %s81 = sphi 0, %s80
      %s97 = sphi 0, %s81
      %s103 = sphi 0, %s105
      %s106 = sphi 0, %s103
      %s107 = sphi 0, %s106
      %s123 = sphi 0, %s107
      %s129 = sphi 0, %s131
      %s132 = sphi 0, %s129
      %s133 = sphi 0, %s132
      %s149 = sphi 0, %s133
    $region4: #{tpu_custom_call.1} parent=1 // loop_header_branch
      %23 = sbr.rel (%p21) target = $region8
    $region5: #{tpu_custom_call.1} parent=1 // loop_body
      %s25 = ssub.s32 %s20, 1
      %s26 = ssub.s32 %s20, 2
      %s27 = sadd.s32 %s20, 1
      %s29 = sadd.s32 %s28, 1
      %p32 = scmp.eq.s32.totalorder %s20, 1
      %p33 = scmp.ne.s32.totalorder %s28, %s30
      %p34 = scmp.eq.s32.totalorder %s20, 0
      %p35 = por %p33, %p34
      %p36 = scmp.ne.s32.totalorder %s28, %s30
      %p37 = scmp.eq.s32.totalorder %s25, 1
      %p38 = por %p36, %p37
      %p39 = scmp.ne.s32.totalorder %s30, %s31
      %p40 = scmp.eq.s32.totalorder %s25, 0
      %p41 = por %p39, %p40
      %p42 = scmp.ne.s32.totalorder %s30, %s31
      %p43 = scmp.eq.s32.totalorder %s26, 1
      %p44 = por %p42, %p43
      %p46 = scmp.ne.s32.totalorder %s31, %s45
      %p47 = scmp.eq.s32.totalorder %s26, 0
      %p48 = por %p46, %p47
      %s49 = ssub.s32 %s20, %s27
      %p50 = scmp.eq.s32.totalorder %s49, 0
      %s52 = sadd.s32 %s51, 1
      %s53 = scalar_select %p50, %s51, %s52
      %p56 = pneg %p50
      %p57 = scmp.eq.s32.totalorder %s20, 1
      %p58 = por %p56, %p57
      %p59 = scmp.ne.s32.totalorder %s51, %s54
      %p60 = scmp.eq.s32.totalorder %s20, 0
      %p61 = por %p59, %p60
      %p62 = scmp.ne.s32.totalorder %s51, %s54
      %p63 = scmp.eq.s32.totalorder %s25, 1
      %p64 = por %p62, %p63
      %p65 = scmp.ne.s32.totalorder %s54, %s55
      %p66 = scmp.eq.s32.totalorder %s25, 0
      %p67 = por %p65, %p66
      %p68 = scmp.ne.s32.totalorder %s54, %s55
      %p69 = scmp.eq.s32.totalorder %s26, 1
      %p70 = por %p68, %p69
      %p72 = scmp.ne.s32.totalorder %s55, %s71
      %p73 = scmp.eq.s32.totalorder %s26, 0
      %p74 = por %p72, %p73
      %s75 = ssub.s32 %s20, %s27
      %p76 = scmp.eq.s32.totalorder %s75, 0
      %s78 = sadd.s32 %s77, 1
      %s79 = scalar_select %p76, %s77, %s78
      %p82 = pneg %p76
      %p83 = scmp.eq.s32.totalorder %s20, 1
      %p84 = por %p82, %p83
      %p85 = scmp.ne.s32.totalorder %s77, %s80
      %p86 = scmp.eq.s32.totalorder %s20, 0
      %p87 = por %p85, %p86
      %p88 = scmp.ne.s32.totalorder %s77, %s80
      %p89 = scmp.eq.s32.totalorder %s25, 1
      %p90 = por %p88, %p89
      %p91 = scmp.ne.s32.totalorder %s80, %s81
      %p92 = scmp.eq.s32.totalorder %s25, 0
      %p93 = por %p91, %p92
      %p94 = scmp.ne.s32.totalorder %s80, %s81
      %p95 = scmp.eq.s32.totalorder %s26, 1
      %p96 = por %p94, %p95
      %p98 = scmp.ne.s32.totalorder %s81, %s97
      %p99 = scmp.eq.s32.totalorder %s26, 0
      %p100 = por %p98, %p99
      %s101 = ssub.s32 %s20, %s27
      %p102 = scmp.eq.s32.totalorder %s101, 0
      %s104 = sadd.s32 %s103, 1
      %s105 = scalar_select %p102, %s103, %s104
      %p108 = pneg %p102
      %p109 = scmp.eq.s32.totalorder %s20, 1
      %p110 = por %p108, %p109
      %p111 = scmp.ne.s32.totalorder %s103, %s106
      %p112 = scmp.eq.s32.totalorder %s20, 0
      %p113 = por %p111, %p112
      %p114 = scmp.ne.s32.totalorder %s103, %s106
      %p115 = scmp.eq.s32.totalorder %s25, 1
      %p116 = por %p114, %p115
      %p117 = scmp.ne.s32.totalorder %s106, %s107
      %p118 = scmp.eq.s32.totalorder %s25, 0
      %p119 = por %p117, %p118
      %p120 = scmp.ne.s32.totalorder %s106, %s107
      %p121 = scmp.eq.s32.totalorder %s26, 1
      %p122 = por %p120, %p121
      %p124 = scmp.ne.s32.totalorder %s107, %s123
      %p125 = scmp.eq.s32.totalorder %s26, 0
      %p126 = por %p124, %p125
      %s127 = ssub.s32 %s20, %s27
      %p128 = scmp.eq.s32.totalorder %s127, 0
      %s130 = sadd.s32 %s129, 1
      %s131 = scalar_select %p128, %s129, %s130
      %p134 = pneg %p128
      %p135 = scmp.eq.s32.totalorder %s20, 1
      %p136 = por %p134, %p135
      %p137 = scmp.ne.s32.totalorder %s129, %s132
      %p138 = scmp.eq.s32.totalorder %s20, 0
      %p139 = por %p137, %p138
      %p140 = scmp.ne.s32.totalorder %s129, %s132
      %p141 = scmp.eq.s32.totalorder %s25, 1
      %p142 = por %p140, %p141
      %p143 = scmp.ne.s32.totalorder %s132, %s133
      %p144 = scmp.eq.s32.totalorder %s25, 0
      %p145 = por %p143, %p144
      %p146 = scmp.ne.s32.totalorder %s132, %s133
      %p147 = scmp.eq.s32.totalorder %s26, 1
      %p148 = por %p146, %p147
      %p150 = scmp.ne.s32.totalorder %s133, %s149
      %p151 = scmp.eq.s32.totalorder %s26, 0
      %p152 = por %p150, %p151
      %p153 = scmp.le.s32.totalorder 1, %s20
      %p154 = scmp.lt.s32.totalorder %s20, 3
      %p155 = pnand %p153, %p154
      %p156 = pneg %p155
      // Predicated region
      $region9: #{tpu_custom_call.1} parent=5 // pred_check
        _
      $region10: #{tpu_custom_call.1} parent=5 // pred_check_branch
        %158 = sbr.rel (%p155) target = $region12
      $region11: #{tpu_custom_call.1} parent=5 // pred_region
        %s159 = ssub.s32 %s20, 1
        // Predicated region
        $region13: #{tpu_custom_call.1} parent=11 // pred_check
          %p160 = pneg %p41
        $region14: #{tpu_custom_call.1} parent=11 // pred_check_branch
          %162 = sbr.rel (%p160) target = $region16
        $region15: #{tpu_custom_call.1} parent=11 // pred_region
          %s164 = ssub.s32 96, 96
          %165 = vsyncadd [#allocation3], %s164
          %s167 = sshll.u32 [#allocation2], 4
          %s168 = int_to_ptr.vmem [resolvable:$true] %s167
          %170 = dma.hbm_to_vmem [thread:$0]  %s0, 96, %s168, [#allocation3]
        $region16: #{tpu_custom_call.1} parent=11 // pred_fallthru
          _
      $region12: #{tpu_custom_call.1} parent=5 // pred_fallthru
        _
      %p171 = scmp.lt.s32.totalorder %s20, 2
      // Predicated region
      $region17: #{tpu_custom_call.1} parent=5 // pred_check
        %p172 = pneg %p171
      $region18: #{tpu_custom_call.1} parent=5 // pred_check_branch
        %174 = sbr.rel (%p172) target = $region20
      $region19: #{tpu_custom_call.1} parent=5 // pred_region
        // Predicated region
        $region21: #{tpu_custom_call.1} parent=19 // pred_check
          %p175 = pneg %p61
        $region22: #{tpu_custom_call.1} parent=19 // pred_check_branch
          %177 = sbr.rel (%p175) target = $region24
        $region23: #{tpu_custom_call.1} parent=19 // pred_region
          %s178 = sand.u32 %s20, 1
          %s179 = scalar_lea.sflag [#allocation6], %s178
          %s180 = sand.u32 %s51, 1
          %s181 = smul.addr %s180, 2304
          %s182 = scalar_lea.vmem [#allocation5], %s181
          %s183 = smul.u32 12, %s20
          %s185 = ssub.s32 36864, 36864
          %186 = vsyncadd %s179, %s185
          %s187 = smul.addr %s183, 128
          %s188 = scalar_lea.hbm %s1, %s187
          %s189 = sshll.u32 %s182, 4
          %s190 = int_to_ptr.vmem [resolvable:$true] %s189
          %195 = dma.hbm_to_vmem [thread:$0]  %s188, 36864, %s190, %s179, 3072, 1536, 96
        $region24: #{tpu_custom_call.1} parent=19 // pred_fallthru
          _
        // Predicated region
        $region25: #{tpu_custom_call.1} parent=19 // pred_check
          %p196 = pneg %p87
        $region26: #{tpu_custom_call.1} parent=19 // pred_check_branch
          %198 = sbr.rel (%p196) target = $region28
        $region27: #{tpu_custom_call.1} parent=19 // pred_region
          %s199 = sand.u32 %s20, 1
          %s200 = scalar_lea.sflag [#allocation6], %s199
          %s201 = sand.u32 %s77, 1
          %s202 = smul.addr %s201, 12
          %s203 = scalar_lea.vmem [#allocation7], %s202
          %s204 = smul.u32 12, %s20
          %s206 = ssub.s32 192, 192
          %207 = vsyncadd %s200, %s206
          %s208 = smul.addr %s204, 16
          %s209 = scalar_lea.hbm %s2, %s208
          %s211 = sshll.u32 %s203, 4
          %s212 = int_to_ptr.vmem [resolvable:$true] %s211
          %214 = dma.hbm_to_vmem [thread:$0]  %s209, 192, %s212, %s200
        $region28: #{tpu_custom_call.1} parent=19 // pred_fallthru
          _
        // Predicated region
        $region29: #{tpu_custom_call.1} parent=19 // pred_check
          %p215 = pneg %p113
        $region30: #{tpu_custom_call.1} parent=19 // pred_check_branch
          %217 = sbr.rel (%p215) target = $region32
        $region31: #{tpu_custom_call.1} parent=19 // pred_region
          %s218 = sand.u32 %s103, 1
          %s219 = scalar_lea.sflag [#allocation9], %s218
          %s220 = sand.u32 %s103, 1
          %s221 = smul.addr %s220, 12
          %s222 = scalar_lea.vmem [#allocation8], %s221
          %s223 = smul.u32 12, %s20
          %s225 = ssub.s32 192, 192
          %226 = vsyncadd %s219, %s225
          %s227 = smul.addr %s223, 16
          %s228 = scalar_lea.hbm %s3, %s227
          %s230 = sshll.u32 %s222, 4
          %s231 = int_to_ptr.vmem [resolvable:$true] %s230
          %233 = dma.hbm_to_vmem [thread:$0]  %s228, 192, %s231, %s219
        $region32: #{tpu_custom_call.1} parent=19 // pred_fallthru
          _
      $region20: #{tpu_custom_call.1} parent=5 // pred_fallthru
        _
      %p234 = scmp.le.s32.totalorder 1, %s20
      %p235 = scmp.lt.s32.totalorder %s20, 3
      %p236 = pnand %p234, %p235
      %p237 = pneg %p236
      // Predicated region
      $region33: #{tpu_custom_call.1} parent=5 // pred_check
        _
      $region34: #{tpu_custom_call.1} parent=5 // pred_check_branch
        %239 = sbr.rel (%p236) target = $region36
      $region35: #{tpu_custom_call.1} parent=5 // pred_region
        %s240 = ssub.s32 %s20, 1
        // Predicated region
        $region37: #{tpu_custom_call.1} parent=35 // pred_check
          %p241 = pneg %p41
        $region38: #{tpu_custom_call.1} parent=35 // pred_check_branch
          %243 = sbr.rel (%p241) target = $region40
        $region39: #{tpu_custom_call.1} parent=35 // pred_region
          %244 = dma.done [#allocation3], 96
        $region40: #{tpu_custom_call.1} parent=35 // pred_fallthru
          _
        %s245 = sand.u32 %s25, 1
        %s246 = scalar_lea.sflag [#allocation6], %s245
        %s247 = sand.u32 %s54, 1
        %s248 = smul.addr %s247, 2304
        %s249 = scalar_lea.vmem [#allocation5], %s248
        // Predicated region
        $region41: #{tpu_custom_call.1} parent=35 // pred_check
          %p250 = pneg %p67
        $region42: #{tpu_custom_call.1} parent=35 // pred_check_branch
          %252 = sbr.rel (%p250) target = $region44
        $region43: #{tpu_custom_call.1} parent=35 // pred_region
          %253 = dma.done %s246, 36864
        $region44: #{tpu_custom_call.1} parent=35 // pred_fallthru
          _
        %s254 = sand.u32 %s25, 1
        %s255 = scalar_lea.sflag [#allocation6], %s254
        %s256 = sand.u32 %s80, 1
        %s257 = smul.addr %s256, 12
        %s258 = scalar_lea.vmem [#allocation7], %s257
        // Predicated region
        $region45: #{tpu_custom_call.1} parent=35 // pred_check
          %p259 = pneg %p93
        $region46: #{tpu_custom_call.1} parent=35 // pred_check_branch
          %261 = sbr.rel (%p259) target = $region48
        $region47: #{tpu_custom_call.1} parent=35 // pred_region
          %262 = dma.done %s255, 192
        $region48: #{tpu_custom_call.1} parent=35 // pred_fallthru
          _
        %s263 = sand.u32 %s106, 1
        %s264 = scalar_lea.sflag [#allocation9], %s263
        %s265 = sand.u32 %s106, 1
        %s266 = smul.addr %s265, 12
        %s267 = scalar_lea.vmem [#allocation8], %s266
        // Predicated region
        $region49: #{tpu_custom_call.1} parent=35 // pred_check
          %p268 = pneg %p119
        $region50: #{tpu_custom_call.1} parent=35 // pred_check_branch
          %270 = sbr.rel (%p268) target = $region52
        $region51: #{tpu_custom_call.1} parent=35 // pred_region
          %271 = dma.done %s264, 192
        $region52: #{tpu_custom_call.1} parent=35 // pred_fallthru
          _
        %p272 = pneg %p41
        %p273 = pneg %p38
        %s274 = sand.u32 %s25, 1
        %s275 = scalar_lea.sflag [#allocation6], %s274
        %s276 = sand.u32 %s54, 1
        %s277 = smul.addr %s276, 2304
        %s278 = scalar_lea.vmem [#allocation5], %s277
        %p279 = pneg %p67
        %p280 = pneg %p64
        %s281 = sand.u32 %s25, 1
        %s282 = scalar_lea.sflag [#allocation6], %s281
        %s283 = sand.u32 %s80, 1
        %s284 = smul.addr %s283, 12
        %s285 = scalar_lea.vmem [#allocation7], %s284
        %p286 = pneg %p93
        %p287 = pneg %p90
        %s288 = sand.u32 %s106, 1
        %s289 = scalar_lea.sflag [#allocation9], %s288
        %s290 = sand.u32 %s106, 1
        %s291 = smul.addr %s290, 12
        %s292 = scalar_lea.vmem [#allocation8], %s291
        %p293 = pneg %p119
        %p294 = pneg %p116
        %p295 = pneg %p145
        %p296 = pneg %p142
        %s297 = sand.u32 %s132, 1
        %s298 = scalar_lea.sflag [#allocation4], %s297
        %s299 = sand.u32 %s132, 1
        %s300 = smul.addr %s299, 12
        %s301 = scalar_lea.vmem [#allocation10], %s300
        %s302 = smul.u32 12, %s25
        %s303 = smul.u32 12, %s25
        %s304 = smul.u32 12, %s25
        %s305 = smul.u32 12, %s25
        %v306 = vld [vmem:[%s249] sm:$0xff]
        %v307 = vld [vmem:[%s249 + $0x8] sm:$0xff]
        %v308 = vld [vmem:[%s249 + $0x10] sm:$0xff]
        %v309 = vld [vmem:[%s249 + $0x18] sm:$0xff]
        %v310 = vld [vmem:[%s249 + $0x20] sm:$0xff]
        %v311 = vld [vmem:[%s249 + $0x28] sm:$0xff]
        %v312 = vld [vmem:[%s249 + $0x30] sm:$0xff]
        %v313 = vld [vmem:[%s249 + $0x38] sm:$0xff]
        %v314 = vld [vmem:[%s249 + $0x40] sm:$0xff]
        %v315 = vld [vmem:[%s249 + $0x48] sm:$0xff]
        %v316 = vld [vmem:[%s249 + $0x50] sm:$0xff]
        %v317 = vld [vmem:[%s249 + $0x58] sm:$0xff]
        %v318 = vld [vmem:[%s249 + $0x60] sm:$0xff]
        %v319 = vld [vmem:[%s249 + $0x68] sm:$0xff]
        %v320 = vld [vmem:[%s249 + $0x70] sm:$0xff]
        %v321 = vld [vmem:[%s249 + $0x78] sm:$0xff]
        %v322 = vld [vmem:[%s249 + $0x80] sm:$0xff]
        %v323 = vld [vmem:[%s249 + $0x88] sm:$0xff]
        %v324 = vld [vmem:[%s249 + $0x90] sm:$0xff]
        %v325 = vld [vmem:[%s249 + $0x98] sm:$0xff]
        %v326 = vld [vmem:[%s249 + $0xa0] sm:$0xff]
        %v327 = vld [vmem:[%s249 + $0xa8] sm:$0xff]
        %v328 = vld [vmem:[%s249 + $0xb0] sm:$0xff]
        %v329 = vld [vmem:[%s249 + $0xb8] sm:$0xff]
        %v330 = vld [vmem:[%s249 + $0xc0] sm:$0xff]
        %v331 = vld [vmem:[%s249 + $0xc8] sm:$0xff]
        %v332 = vld [vmem:[%s249 + $0xd0] sm:$0xff]
        %v333 = vld [vmem:[%s249 + $0xd8] sm:$0xff]
        %v334 = vld [vmem:[%s249 + $0xe0] sm:$0xff]
        %v335 = vld [vmem:[%s249 + $0xe8] sm:$0xff]
        %v336 = vld [vmem:[%s249 + $0xf0] sm:$0xff]
        %v337 = vld [vmem:[%s249 + $0xf8] sm:$0xff]
        %v338 = vld [vmem:[%s249 + $0x100] sm:$0xff]
        %v339 = vld [vmem:[%s249 + $0x108] sm:$0xff]
        %v340 = vld [vmem:[%s249 + $0x110] sm:$0xff]
        %v341 = vld [vmem:[%s249 + $0x118] sm:$0xff]
        %v342 = vld [vmem:[%s249 + $0x120] sm:$0xff]
        %v343 = vld [vmem:[%s249 + $0x128] sm:$0xff]
        %v344 = vld [vmem:[%s249 + $0x130] sm:$0xff]
        %v345 = vld [vmem:[%s249 + $0x138] sm:$0xff]
        %v346 = vld [vmem:[%s249 + $0x140] sm:$0xff]
        %v347 = vld [vmem:[%s249 + $0x148] sm:$0xff]
        %v348 = vld [vmem:[%s249 + $0x150] sm:$0xff]
        %v349 = vld [vmem:[%s249 + $0x158] sm:$0xff]
        %v350 = vld [vmem:[%s249 + $0x160] sm:$0xff]
        %v351 = vld [vmem:[%s249 + $0x168] sm:$0xff]
        %v352 = vld [vmem:[%s249 + $0x170] sm:$0xff]
        %v353 = vld [vmem:[%s249 + $0x178] sm:$0xff]
        %v354 = vld [vmem:[%s249 + $0x180] sm:$0xff]
        %v355 = vld [vmem:[%s249 + $0x188] sm:$0xff]
        %v356 = vld [vmem:[%s249 + $0x190] sm:$0xff]
        %v357 = vld [vmem:[%s249 + $0x198] sm:$0xff]
        %v358 = vld [vmem:[%s249 + $0x1a0] sm:$0xff]
        %v359 = vld [vmem:[%s249 + $0x1a8] sm:$0xff]
        %v360 = vld [vmem:[%s249 + $0x1b0] sm:$0xff]
        %v361 = vld [vmem:[%s249 + $0x1b8] sm:$0xff]
        %v362 = vld [vmem:[%s249 + $0x1c0] sm:$0xff]
        %v363 = vld [vmem:[%s249 + $0x1c8] sm:$0xff]
        %v364 = vld [vmem:[%s249 + $0x1d0] sm:$0xff]
        %v365 = vld [vmem:[%s249 + $0x1d8] sm:$0xff]
        %v366 = vld [vmem:[%s249 + $0x1e0] sm:$0xff]
        %v367 = vld [vmem:[%s249 + $0x1e8] sm:$0xff]
        %v368 = vld [vmem:[%s249 + $0x1f0] sm:$0xff]
        %v369 = vld [vmem:[%s249 + $0x1f8] sm:$0xff]
        %v370 = vld [vmem:[%s249 + $0x200] sm:$0xff]
        %v371 = vld [vmem:[%s249 + $0x208] sm:$0xff]
        %v372 = vld [vmem:[%s249 + $0x210] sm:$0xff]
        %v373 = vld [vmem:[%s249 + $0x218] sm:$0xff]
        %v374 = vld [vmem:[%s249 + $0x220] sm:$0xff]
        %v375 = vld [vmem:[%s249 + $0x228] sm:$0xff]
        %v376 = vld [vmem:[%s249 + $0x230] sm:$0xff]
        %v377 = vld [vmem:[%s249 + $0x238] sm:$0xff]
        %v378 = vld [vmem:[%s249 + $0x240] sm:$0xff]
        %v379 = vld [vmem:[%s249 + $0x248] sm:$0xff]
        %v380 = vld [vmem:[%s249 + $0x250] sm:$0xff]
        %v381 = vld [vmem:[%s249 + $0x258] sm:$0xff]
        %v382 = vld [vmem:[%s249 + $0x260] sm:$0xff]
        %v383 = vld [vmem:[%s249 + $0x268] sm:$0xff]
        %v384 = vld [vmem:[%s249 + $0x270] sm:$0xff]
        %v385 = vld [vmem:[%s249 + $0x278] sm:$0xff]
        %v386 = vld [vmem:[%s249 + $0x280] sm:$0xff]
        %v387 = vld [vmem:[%s249 + $0x288] sm:$0xff]
        %v388 = vld [vmem:[%s249 + $0x290] sm:$0xff]
        %v389 = vld [vmem:[%s249 + $0x298] sm:$0xff]
        %v390 = vld [vmem:[%s249 + $0x2a0] sm:$0xff]
        %v391 = vld [vmem:[%s249 + $0x2a8] sm:$0xff]
        %v392 = vld [vmem:[%s249 + $0x2b0] sm:$0xff]
        %v393 = vld [vmem:[%s249 + $0x2b8] sm:$0xff]
        %v394 = vld [vmem:[%s249 + $0x2c0] sm:$0xff]
        %v395 = vld [vmem:[%s249 + $0x2c8] sm:$0xff]
        %v396 = vld [vmem:[%s249 + $0x2d0] sm:$0xff]
        %v397 = vld [vmem:[%s249 + $0x2d8] sm:$0xff]
        %v398 = vld [vmem:[%s249 + $0x2e0] sm:$0xff]
        %v399 = vld [vmem:[%s249 + $0x2e8] sm:$0xff]
        %v400 = vld [vmem:[%s249 + $0x2f0] sm:$0xff]
        %v401 = vld [vmem:[%s249 + $0x2f8] sm:$0xff]
        %v402 = vld [vmem:[%s249 + $0x300] sm:$0xff]
        %v403 = vld [vmem:[%s249 + $0x308] sm:$0xff]
        %v404 = vld [vmem:[%s249 + $0x310] sm:$0xff]
        %v405 = vld [vmem:[%s249 + $0x318] sm:$0xff]
        %v406 = vld [vmem:[%s249 + $0x320] sm:$0xff]
        %v407 = vld [vmem:[%s249 + $0x328] sm:$0xff]
        %v408 = vld [vmem:[%s249 + $0x330] sm:$0xff]
        %v409 = vld [vmem:[%s249 + $0x338] sm:$0xff]
        %v410 = vld [vmem:[%s249 + $0x340] sm:$0xff]
        %v411 = vld [vmem:[%s249 + $0x348] sm:$0xff]
        %v412 = vld [vmem:[%s249 + $0x350] sm:$0xff]
        %v413 = vld [vmem:[%s249 + $0x358] sm:$0xff]
        %v414 = vld [vmem:[%s249 + $0x360] sm:$0xff]
        %v415 = vld [vmem:[%s249 + $0x368] sm:$0xff]
        %v416 = vld [vmem:[%s249 + $0x370] sm:$0xff]
        %v417 = vld [vmem:[%s249 + $0x378] sm:$0xff]
        %v418 = vld [vmem:[%s249 + $0x380] sm:$0xff]
        %v419 = vld [vmem:[%s249 + $0x388] sm:$0xff]
        %v420 = vld [vmem:[%s249 + $0x390] sm:$0xff]
        %v421 = vld [vmem:[%s249 + $0x398] sm:$0xff]
        %v422 = vld [vmem:[%s249 + $0x3a0] sm:$0xff]
        %v423 = vld [vmem:[%s249 + $0x3a8] sm:$0xff]
        %v424 = vld [vmem:[%s249 + $0x3b0] sm:$0xff]
        %v425 = vld [vmem:[%s249 + $0x3b8] sm:$0xff]
        %v426 = vld [vmem:[%s249 + $0x3c0] sm:$0xff]
        %v427 = vld [vmem:[%s249 + $0x3c8] sm:$0xff]
        %v428 = vld [vmem:[%s249 + $0x3d0] sm:$0xff]
        %v429 = vld [vmem:[%s249 + $0x3d8] sm:$0xff]
        %v430 = vld [vmem:[%s249 + $0x3e0] sm:$0xff]
        %v431 = vld [vmem:[%s249 + $0x3e8] sm:$0xff]
        %v432 = vld [vmem:[%s249 + $0x3f0] sm:$0xff]
        %v433 = vld [vmem:[%s249 + $0x3f8] sm:$0xff]
        %v434 = vld [vmem:[%s249 + $0x400] sm:$0xff]
        %v435 = vld [vmem:[%s249 + $0x408] sm:$0xff]
        %v436 = vld [vmem:[%s249 + $0x410] sm:$0xff]
        %v437 = vld [vmem:[%s249 + $0x418] sm:$0xff]
        %v438 = vld [vmem:[%s249 + $0x420] sm:$0xff]
        %v439 = vld [vmem:[%s249 + $0x428] sm:$0xff]
        %v440 = vld [vmem:[%s249 + $0x430] sm:$0xff]
        %v441 = vld [vmem:[%s249 + $0x438] sm:$0xff]
        %v442 = vld [vmem:[%s249 + $0x440] sm:$0xff]
        %v443 = vld [vmem:[%s249 + $0x448] sm:$0xff]
        %v444 = vld [vmem:[%s249 + $0x450] sm:$0xff]
        %v445 = vld [vmem:[%s249 + $0x458] sm:$0xff]
        %v446 = vld [vmem:[%s249 + $0x460] sm:$0xff]
        %v447 = vld [vmem:[%s249 + $0x468] sm:$0xff]
        %v448 = vld [vmem:[%s249 + $0x470] sm:$0xff]
        %v449 = vld [vmem:[%s249 + $0x478] sm:$0xff]
        %v450 = vld [vmem:[%s249 + $0x480] sm:$0xff]
        %v451 = vld [vmem:[%s249 + $0x488] sm:$0xff]
        %v452 = vld [vmem:[%s249 + $0x490] sm:$0xff]
        %v453 = vld [vmem:[%s249 + $0x498] sm:$0xff]
        %v454 = vld [vmem:[%s249 + $0x4a0] sm:$0xff]
        %v455 = vld [vmem:[%s249 + $0x4a8] sm:$0xff]
        %v456 = vld [vmem:[%s249 + $0x4b0] sm:$0xff]
        %v457 = vld [vmem:[%s249 + $0x4b8] sm:$0xff]
        %v458 = vld [vmem:[%s249 + $0x4c0] sm:$0xff]
        %v459 = vld [vmem:[%s249 + $0x4c8] sm:$0xff]
        %v460 = vld [vmem:[%s249 + $0x4d0] sm:$0xff]
        %v461 = vld [vmem:[%s249 + $0x4d8] sm:$0xff]
        %v462 = vld [vmem:[%s249 + $0x4e0] sm:$0xff]
        %v463 = vld [vmem:[%s249 + $0x4e8] sm:$0xff]
        %v464 = vld [vmem:[%s249 + $0x4f0] sm:$0xff]
        %v465 = vld [vmem:[%s249 + $0x4f8] sm:$0xff]
        %v466 = vld [vmem:[%s249 + $0x500] sm:$0xff]
        %v467 = vld [vmem:[%s249 + $0x508] sm:$0xff]
        %v468 = vld [vmem:[%s249 + $0x510] sm:$0xff]
        %v469 = vld [vmem:[%s249 + $0x518] sm:$0xff]
        %v470 = vld [vmem:[%s249 + $0x520] sm:$0xff]
        %v471 = vld [vmem:[%s249 + $0x528] sm:$0xff]
        %v472 = vld [vmem:[%s249 + $0x530] sm:$0xff]
        %v473 = vld [vmem:[%s249 + $0x538] sm:$0xff]
        %v474 = vld [vmem:[%s249 + $0x540] sm:$0xff]
        %v475 = vld [vmem:[%s249 + $0x548] sm:$0xff]
        %v476 = vld [vmem:[%s249 + $0x550] sm:$0xff]
        %v477 = vld [vmem:[%s249 + $0x558] sm:$0xff]
        %v478 = vld [vmem:[%s249 + $0x560] sm:$0xff]
        %v479 = vld [vmem:[%s249 + $0x568] sm:$0xff]
        %v480 = vld [vmem:[%s249 + $0x570] sm:$0xff]
        %v481 = vld [vmem:[%s249 + $0x578] sm:$0xff]
        %v482 = vld [vmem:[%s249 + $0x580] sm:$0xff]
        %v483 = vld [vmem:[%s249 + $0x588] sm:$0xff]
        %v484 = vld [vmem:[%s249 + $0x590] sm:$0xff]
        %v485 = vld [vmem:[%s249 + $0x598] sm:$0xff]
        %v486 = vld [vmem:[%s249 + $0x5a0] sm:$0xff]
        %v487 = vld [vmem:[%s249 + $0x5a8] sm:$0xff]
        %v488 = vld [vmem:[%s249 + $0x5b0] sm:$0xff]
        %v489 = vld [vmem:[%s249 + $0x5b8] sm:$0xff]
        %v490 = vld [vmem:[%s249 + $0x5c0] sm:$0xff]
        %v491 = vld [vmem:[%s249 + $0x5c8] sm:$0xff]
        %v492 = vld [vmem:[%s249 + $0x5d0] sm:$0xff]
        %v493 = vld [vmem:[%s249 + $0x5d8] sm:$0xff]
        %v494 = vld [vmem:[%s249 + $0x5e0] sm:$0xff]
        %v495 = vld [vmem:[%s249 + $0x5e8] sm:$0xff]
        %v496 = vld [vmem:[%s249 + $0x5f0] sm:$0xff]
        %v497 = vld [vmem:[%s249 + $0x5f8] sm:$0xff]
        %v498 = vld [vmem:[%s249 + $0x600] sm:$0xff]
        %v499 = vld [vmem:[%s249 + $0x608] sm:$0xff]
        %v500 = vld [vmem:[%s249 + $0x610] sm:$0xff]
        %v501 = vld [vmem:[%s249 + $0x618] sm:$0xff]
        %v502 = vld [vmem:[%s249 + $0x620] sm:$0xff]
        %v503 = vld [vmem:[%s249 + $0x628] sm:$0xff]
        %v504 = vld [vmem:[%s249 + $0x630] sm:$0xff]
        %v505 = vld [vmem:[%s249 + $0x638] sm:$0xff]
        %v506 = vld [vmem:[%s249 + $0x640] sm:$0xff]
        %v507 = vld [vmem:[%s249 + $0x648] sm:$0xff]
        %v508 = vld [vmem:[%s249 + $0x650] sm:$0xff]
        %v509 = vld [vmem:[%s249 + $0x658] sm:$0xff]
        %v510 = vld [vmem:[%s249 + $0x660] sm:$0xff]
        %v511 = vld [vmem:[%s249 + $0x668] sm:$0xff]
        %v512 = vld [vmem:[%s249 + $0x670] sm:$0xff]
        %v513 = vld [vmem:[%s249 + $0x678] sm:$0xff]
        %v514 = vld [vmem:[%s249 + $0x680] sm:$0xff]
        %v515 = vld [vmem:[%s249 + $0x688] sm:$0xff]
        %v516 = vld [vmem:[%s249 + $0x690] sm:$0xff]
        %v517 = vld [vmem:[%s249 + $0x698] sm:$0xff]
        %v518 = vld [vmem:[%s249 + $0x6a0] sm:$0xff]
        %v519 = vld [vmem:[%s249 + $0x6a8] sm:$0xff]
        %v520 = vld [vmem:[%s249 + $0x6b0] sm:$0xff]
        %v521 = vld [vmem:[%s249 + $0x6b8] sm:$0xff]
        %v522 = vld [vmem:[%s249 + $0x6c0] sm:$0xff]
        %v523 = vld [vmem:[%s249 + $0x6c8] sm:$0xff]
        %v524 = vld [vmem:[%s249 + $0x6d0] sm:$0xff]
        %v525 = vld [vmem:[%s249 + $0x6d8] sm:$0xff]
        %v526 = vld [vmem:[%s249 + $0x6e0] sm:$0xff]
        %v527 = vld [vmem:[%s249 + $0x6e8] sm:$0xff]
        %v528 = vld [vmem:[%s249 + $0x6f0] sm:$0xff]
        %v529 = vld [vmem:[%s249 + $0x6f8] sm:$0xff]
        %v530 = vld [vmem:[%s249 + $0x700] sm:$0xff]
        %v531 = vld [vmem:[%s249 + $0x708] sm:$0xff]
        %v532 = vld [vmem:[%s249 + $0x710] sm:$0xff]
        %v533 = vld [vmem:[%s249 + $0x718] sm:$0xff]
        %v534 = vld [vmem:[%s249 + $0x720] sm:$0xff]
        %v535 = vld [vmem:[%s249 + $0x728] sm:$0xff]
        %v536 = vld [vmem:[%s249 + $0x730] sm:$0xff]
        %v537 = vld [vmem:[%s249 + $0x738] sm:$0xff]
        %v538 = vld [vmem:[%s249 + $0x740] sm:$0xff]
        %v539 = vld [vmem:[%s249 + $0x748] sm:$0xff]
        %v540 = vld [vmem:[%s249 + $0x750] sm:$0xff]
        %v541 = vld [vmem:[%s249 + $0x758] sm:$0xff]
        %v542 = vld [vmem:[%s249 + $0x760] sm:$0xff]
        %v543 = vld [vmem:[%s249 + $0x768] sm:$0xff]
        %v544 = vld [vmem:[%s249 + $0x770] sm:$0xff]
        %v545 = vld [vmem:[%s249 + $0x778] sm:$0xff]
        %v546 = vld [vmem:[%s249 + $0x780] sm:$0xff]
        %v547 = vld [vmem:[%s249 + $0x788] sm:$0xff]
        %v548 = vld [vmem:[%s249 + $0x790] sm:$0xff]
        %v549 = vld [vmem:[%s249 + $0x798] sm:$0xff]
        %v550 = vld [vmem:[%s249 + $0x7a0] sm:$0xff]
        %v551 = vld [vmem:[%s249 + $0x7a8] sm:$0xff]
        %v552 = vld [vmem:[%s249 + $0x7b0] sm:$0xff]
        %v553 = vld [vmem:[%s249 + $0x7b8] sm:$0xff]
        %v554 = vld [vmem:[%s249 + $0x7c0] sm:$0xff]
        %v555 = vld [vmem:[%s249 + $0x7c8] sm:$0xff]
        %v556 = vld [vmem:[%s249 + $0x7d0] sm:$0xff]
        %v557 = vld [vmem:[%s249 + $0x7d8] sm:$0xff]
        %v558 = vld [vmem:[%s249 + $0x7e0] sm:$0xff]
        %v559 = vld [vmem:[%s249 + $0x7e8] sm:$0xff]
        %v560 = vld [vmem:[%s249 + $0x7f0] sm:$0xff]
        %v561 = vld [vmem:[%s249 + $0x7f8] sm:$0xff]
        %v562 = vld [vmem:[%s249 + $0x800] sm:$0xff]
        %v563 = vld [vmem:[%s249 + $0x808] sm:$0xff]
        %v564 = vld [vmem:[%s249 + $0x810] sm:$0xff]
        %v565 = vld [vmem:[%s249 + $0x818] sm:$0xff]
        %v566 = vld [vmem:[%s249 + $0x820] sm:$0xff]
        %v567 = vld [vmem:[%s249 + $0x828] sm:$0xff]
        %v568 = vld [vmem:[%s249 + $0x830] sm:$0xff]
        %v569 = vld [vmem:[%s249 + $0x838] sm:$0xff]
        %v570 = vld [vmem:[%s249 + $0x840] sm:$0xff]
        %v571 = vld [vmem:[%s249 + $0x848] sm:$0xff]
        %v572 = vld [vmem:[%s249 + $0x850] sm:$0xff]
        %v573 = vld [vmem:[%s249 + $0x858] sm:$0xff]
        %v574 = vld [vmem:[%s249 + $0x860] sm:$0xff]
        %v575 = vld [vmem:[%s249 + $0x868] sm:$0xff]
        %v576 = vld [vmem:[%s249 + $0x870] sm:$0xff]
        %v577 = vld [vmem:[%s249 + $0x878] sm:$0xff]
        %v578 = vld [vmem:[%s249 + $0x880] sm:$0xff]
        %v579 = vld [vmem:[%s249 + $0x888] sm:$0xff]
        %v580 = vld [vmem:[%s249 + $0x890] sm:$0xff]
        %v581 = vld [vmem:[%s249 + $0x898] sm:$0xff]
        %v582 = vld [vmem:[%s249 + $0x8a0] sm:$0xff]
        %v583 = vld [vmem:[%s249 + $0x8a8] sm:$0xff]
        %v584 = vld [vmem:[%s249 + $0x8b0] sm:$0xff]
        %v585 = vld [vmem:[%s249 + $0x8b8] sm:$0xff]
        %v586 = vld [vmem:[%s249 + $0x8c0] sm:$0xff]
        %v587 = vld [vmem:[%s249 + $0x8c8] sm:$0xff]
        %v588 = vld [vmem:[%s249 + $0x8d0] sm:$0xff]
        %v589 = vld [vmem:[%s249 + $0x8d8] sm:$0xff]
        %v590 = vld [vmem:[%s249 + $0x8e0] sm:$0xff]
        %v591 = vld [vmem:[%s249 + $0x8e8] sm:$0xff]
        %v592 = vld [vmem:[%s249 + $0x8f0] sm:$0xff]
        %v593 = vld [vmem:[%s249 + $0x8f8] sm:$0xff]
        %v594 = vunpack.c.l.s8.bf16 %v306
        %v595 = vunpack.c.l.s8.bf16 %v307
        %v596 = vunpack.c.l.s8.bf16 %v308
        %v597 = vunpack.c.l.s8.bf16 %v309
        %v598 = vunpack.c.l.s8.bf16 %v310
        %v599 = vunpack.c.l.s8.bf16 %v311
        %v600 = vunpack.c.l.s8.bf16 %v312
        %v601 = vunpack.c.l.s8.bf16 %v313
        %v602 = vunpack.c.l.s8.bf16 %v314
        %v603 = vunpack.c.l.s8.bf16 %v315
        %v604 = vunpack.c.l.s8.bf16 %v316
        %v605 = vunpack.c.l.s8.bf16 %v317
        %v606 = vunpack.c.h.s8.bf16 %v306
        %v607 = vunpack.c.h.s8.bf16 %v307
        %v608 = vunpack.c.h.s8.bf16 %v308
        %v609 = vunpack.c.h.s8.bf16 %v309
        %v610 = vunpack.c.h.s8.bf16 %v310
        %v611 = vunpack.c.h.s8.bf16 %v311
        %v612 = vunpack.c.h.s8.bf16 %v312
        %v613 = vunpack.c.h.s8.bf16 %v313
        %v614 = vunpack.c.h.s8.bf16 %v314
        %v615 = vunpack.c.h.s8.bf16 %v315
        %v616 = vunpack.c.h.s8.bf16 %v316
        %v617 = vunpack.c.h.s8.bf16 %v317
        %v618 = vunpack.c.l.s8.bf16 %v318
        %v619 = vunpack.c.l.s8.bf16 %v319
        %v620 = vunpack.c.l.s8.bf16 %v320
        %v621 = vunpack.c.l.s8.bf16 %v321
        %v622 = vunpack.c.l.s8.bf16 %v322
        %v623 = vunpack.c.l.s8.bf16 %v323
        %v624 = vunpack.c.l.s8.bf16 %v324
        %v625 = vunpack.c.l.s8.bf16 %v325
        %v626 = vunpack.c.l.s8.bf16 %v326
        %v627 = vunpack.c.l.s8.bf16 %v327
        %v628 = vunpack.c.l.s8.bf16 %v328
        %v629 = vunpack.c.l.s8.bf16 %v329
        %v630 = vunpack.c.h.s8.bf16 %v318
        %v631 = vunpack.c.h.s8.bf16 %v319
        %v632 = vunpack.c.h.s8.bf16 %v320
        %v633 = vunpack.c.h.s8.bf16 %v321
        %v634 = vunpack.c.h.s8.bf16 %v322
        %v635 = vunpack.c.h.s8.bf16 %v323
        %v636 = vunpack.c.h.s8.bf16 %v324
        %v637 = vunpack.c.h.s8.bf16 %v325
        %v638 = vunpack.c.h.s8.bf16 %v326
        %v639 = vunpack.c.h.s8.bf16 %v327
        %v640 = vunpack.c.h.s8.bf16 %v328
        %v641 = vunpack.c.h.s8.bf16 %v329
        %v642 = vunpack.c.l.s8.bf16 %v330
        %v643 = vunpack.c.l.s8.bf16 %v331
        %v644 = vunpack.c.l.s8.bf16 %v332
        %v645 = vunpack.c.l.s8.bf16 %v333
        %v646 = vunpack.c.l.s8.bf16 %v334
        %v647 = vunpack.c.l.s8.bf16 %v335
        %v648 = vunpack.c.l.s8.bf16 %v336
        %v649 = vunpack.c.l.s8.bf16 %v337
        %v650 = vunpack.c.l.s8.bf16 %v338
        %v651 = vunpack.c.l.s8.bf16 %v339
        %v652 = vunpack.c.l.s8.bf16 %v340
        %v653 = vunpack.c.l.s8.bf16 %v341
        %v654 = vunpack.c.h.s8.bf16 %v330
        %v655 = vunpack.c.h.s8.bf16 %v331
        %v656 = vunpack.c.h.s8.bf16 %v332
        %v657 = vunpack.c.h.s8.bf16 %v333
        %v658 = vunpack.c.h.s8.bf16 %v334
        %v659 = vunpack.c.h.s8.bf16 %v335
        %v660 = vunpack.c.h.s8.bf16 %v336
        %v661 = vunpack.c.h.s8.bf16 %v337
        %v662 = vunpack.c.h.s8.bf16 %v338
        %v663 = vunpack.c.h.s8.bf16 %v339
        %v664 = vunpack.c.h.s8.bf16 %v340
        %v665 = vunpack.c.h.s8.bf16 %v341
        %v666 = vunpack.c.l.s8.bf16 %v342
        %v667 = vunpack.c.l.s8.bf16 %v343
        %v668 = vunpack.c.l.s8.bf16 %v344
        %v669 = vunpack.c.l.s8.bf16 %v345
        %v670 = vunpack.c.l.s8.bf16 %v346
        %v671 = vunpack.c.l.s8.bf16 %v347
        %v672 = vunpack.c.l.s8.bf16 %v348
        %v673 = vunpack.c.l.s8.bf16 %v349
        %v674 = vunpack.c.l.s8.bf16 %v350
        %v675 = vunpack.c.l.s8.bf16 %v351
        %v676 = vunpack.c.l.s8.bf16 %v352
        %v677 = vunpack.c.l.s8.bf16 %v353
        %v678 = vunpack.c.h.s8.bf16 %v342
        %v679 = vunpack.c.h.s8.bf16 %v343
        %v680 = vunpack.c.h.s8.bf16 %v344
        %v681 = vunpack.c.h.s8.bf16 %v345
        %v682 = vunpack.c.h.s8.bf16 %v346
        %v683 = vunpack.c.h.s8.bf16 %v347
        %v684 = vunpack.c.h.s8.bf16 %v348
        %v685 = vunpack.c.h.s8.bf16 %v349
        %v686 = vunpack.c.h.s8.bf16 %v350
        %v687 = vunpack.c.h.s8.bf16 %v351
        %v688 = vunpack.c.h.s8.bf16 %v352
        %v689 = vunpack.c.h.s8.bf16 %v353
        %v690 = vunpack.c.l.s8.bf16 %v354
        %v691 = vunpack.c.l.s8.bf16 %v355
        %v692 = vunpack.c.l.s8.bf16 %v356
        %v693 = vunpack.c.l.s8.bf16 %v357
        %v694 = vunpack.c.l.s8.bf16 %v358
        %v695 = vunpack.c.l.s8.bf16 %v359
        %v696 = vunpack.c.l.s8.bf16 %v360
        %v697 = vunpack.c.l.s8.bf16 %v361
        %v698 = vunpack.c.l.s8.bf16 %v362
        %v699 = vunpack.c.l.s8.bf16 %v363
        %v700 = vunpack.c.l.s8.bf16 %v364
        %v701 = vunpack.c.l.s8.bf16 %v365
        %v702 = vunpack.c.h.s8.bf16 %v354
        %v703 = vunpack.c.h.s8.bf16 %v355
        %v704 = vunpack.c.h.s8.bf16 %v356
        %v705 = vunpack.c.h.s8.bf16 %v357
        %v706 = vunpack.c.h.s8.bf16 %v358
        %v707 = vunpack.c.h.s8.bf16 %v359
        %v708 = vunpack.c.h.s8.bf16 %v360
        %v709 = vunpack.c.h.s8.bf16 %v361
        %v710 = vunpack.c.h.s8.bf16 %v362
        %v711 = vunpack.c.h.s8.bf16 %v363
        %v712 = vunpack.c.h.s8.bf16 %v364
        %v713 = vunpack.c.h.s8.bf16 %v365
        %v714 = vunpack.c.l.s8.bf16 %v366
        %v715 = vunpack.c.l.s8.bf16 %v367
        %v716 = vunpack.c.l.s8.bf16 %v368
        %v717 = vunpack.c.l.s8.bf16 %v369
        %v718 = vunpack.c.l.s8.bf16 %v370
        %v719 = vunpack.c.l.s8.bf16 %v371
        %v720 = vunpack.c.l.s8.bf16 %v372
        %v721 = vunpack.c.l.s8.bf16 %v373
        %v722 = vunpack.c.l.s8.bf16 %v374
        %v723 = vunpack.c.l.s8.bf16 %v375
        %v724 = vunpack.c.l.s8.bf16 %v376
        %v725 = vunpack.c.l.s8.bf16 %v377
        %v726 = vunpack.c.h.s8.bf16 %v366
        %v727 = vunpack.c.h.s8.bf16 %v367
        %v728 = vunpack.c.h.s8.bf16 %v368
        %v729 = vunpack.c.h.s8.bf16 %v369
        %v730 = vunpack.c.h.s8.bf16 %v370
        %v731 = vunpack.c.h.s8.bf16 %v371
        %v732 = vunpack.c.h.s8.bf16 %v372
        %v733 = vunpack.c.h.s8.bf16 %v373
        %v734 = vunpack.c.h.s8.bf16 %v374
        %v735 = vunpack.c.h.s8.bf16 %v375
        %v736 = vunpack.c.h.s8.bf16 %v376
        %v737 = vunpack.c.h.s8.bf16 %v377
        %v738 = vunpack.c.l.s8.bf16 %v378
        %v739 = vunpack.c.l.s8.bf16 %v379
        %v740 = vunpack.c.l.s8.bf16 %v380
        %v741 = vunpack.c.l.s8.bf16 %v381
        %v742 = vunpack.c.l.s8.bf16 %v382
        %v743 = vunpack.c.l.s8.bf16 %v383
        %v744 = vunpack.c.l.s8.bf16 %v384
        %v745 = vunpack.c.l.s8.bf16 %v385
        %v746 = vunpack.c.l.s8.bf16 %v386
        %v747 = vunpack.c.l.s8.bf16 %v387
        %v748 = vunpack.c.l.s8.bf16 %v388
        %v749 = vunpack.c.l.s8.bf16 %v389
        %v750 = vunpack.c.h.s8.bf16 %v378
        %v751 = vunpack.c.h.s8.bf16 %v379
        %v752 = vunpack.c.h.s8.bf16 %v380
        %v753 = vunpack.c.h.s8.bf16 %v381
        %v754 = vunpack.c.h.s8.bf16 %v382
        %v755 = vunpack.c.h.s8.bf16 %v383
        %v756 = vunpack.c.h.s8.bf16 %v384
        %v757 = vunpack.c.h.s8.bf16 %v385
        %v758 = vunpack.c.h.s8.bf16 %v386
        %v759 = vunpack.c.h.s8.bf16 %v387
        %v760 = vunpack.c.h.s8.bf16 %v388
        %v761 = vunpack.c.h.s8.bf16 %v389
        %v762 = vunpack.c.l.s8.bf16 %v390
        %v763 = vunpack.c.l.s8.bf16 %v391
        %v764 = vunpack.c.l.s8.bf16 %v392
        %v765 = vunpack.c.l.s8.bf16 %v393
        %v766 = vunpack.c.l.s8.bf16 %v394
        %v767 = vunpack.c.l.s8.bf16 %v395
        %v768 = vunpack.c.l.s8.bf16 %v396
        %v769 = vunpack.c.l.s8.bf16 %v397
        %v770 = vunpack.c.l.s8.bf16 %v398
        %v771 = vunpack.c.l.s8.bf16 %v399
        %v772 = vunpack.c.l.s8.bf16 %v400
        %v773 = vunpack.c.l.s8.bf16 %v401
        %v774 = vunpack.c.h.s8.bf16 %v390
        %v775 = vunpack.c.h.s8.bf16 %v391
        %v776 = vunpack.c.h.s8.bf16 %v392
        %v777 = vunpack.c.h.s8.bf16 %v393
        %v778 = vunpack.c.h.s8.bf16 %v394
        %v779 = vunpack.c.h.s8.bf16 %v395
        %v780 = vunpack.c.h.s8.bf16 %v396
        %v781 = vunpack.c.h.s8.bf16 %v397
        %v782 = vunpack.c.h.s8.bf16 %v398
        %v783 = vunpack.c.h.s8.bf16 %v399
        %v784 = vunpack.c.h.s8.bf16 %v400
        %v785 = vunpack.c.h.s8.bf16 %v401
        %v786 = vunpack.c.l.s8.bf16 %v402
        %v787 = vunpack.c.l.s8.bf16 %v403
        %v788 = vunpack.c.l.s8.bf16 %v404
        %v789 = vunpack.c.l.s8.bf16 %v405
        %v790 = vunpack.c.l.s8.bf16 %v406
        %v791 = vunpack.c.l.s8.bf16 %v407
        %v792 = vunpack.c.l.s8.bf16 %v408
        %v793 = vunpack.c.l.s8.bf16 %v409
        %v794 = vunpack.c.l.s8.bf16 %v410
        %v795 = vunpack.c.l.s8.bf16 %v411
        %v796 = vunpack.c.l.s8.bf16 %v412
        %v797 = vunpack.c.l.s8.bf16 %v413
        %v798 = vunpack.c.h.s8.bf16 %v402
        %v799 = vunpack.c.h.s8.bf16 %v403
        %v800 = vunpack.c.h.s8.bf16 %v404
        %v801 = vunpack.c.h.s8.bf16 %v405
        %v802 = vunpack.c.h.s8.bf16 %v406
        %v803 = vunpack.c.h.s8.bf16 %v407
        %v804 = vunpack.c.h.s8.bf16 %v408
        %v805 = vunpack.c.h.s8.bf16 %v409
        %v806 = vunpack.c.h.s8.bf16 %v410
        %v807 = vunpack.c.h.s8.bf16 %v411
        %v808 = vunpack.c.h.s8.bf16 %v412
        %v809 = vunpack.c.h.s8.bf16 %v413
        %v810 = vunpack.c.l.s8.bf16 %v414
        %v811 = vunpack.c.l.s8.bf16 %v415
        %v812 = vunpack.c.l.s8.bf16 %v416
        %v813 = vunpack.c.l.s8.bf16 %v417
        %v814 = vunpack.c.l.s8.bf16 %v418
        %v815 = vunpack.c.l.s8.bf16 %v419
        %v816 = vunpack.c.l.s8.bf16 %v420
        %v817 = vunpack.c.l.s8.bf16 %v421
        %v818 = vunpack.c.l.s8.bf16 %v422
        %v819 = vunpack.c.l.s8.bf16 %v423
        %v820 = vunpack.c.l.s8.bf16 %v424
        %v821 = vunpack.c.l.s8.bf16 %v425
        %v822 = vunpack.c.h.s8.bf16 %v414
        %v823 = vunpack.c.h.s8.bf16 %v415
        %v824 = vunpack.c.h.s8.bf16 %v416
        %v825 = vunpack.c.h.s8.bf16 %v417
        %v826 = vunpack.c.h.s8.bf16 %v418
        %v827 = vunpack.c.h.s8.bf16 %v419
        %v828 = vunpack.c.h.s8.bf16 %v420
        %v829 = vunpack.c.h.s8.bf16 %v421
        %v830 = vunpack.c.h.s8.bf16 %v422
        %v831 = vunpack.c.h.s8.bf16 %v423
        %v832 = vunpack.c.h.s8.bf16 %v424
        %v833 = vunpack.c.h.s8.bf16 %v425
        %v834 = vunpack.c.l.s8.bf16 %v426
        %v835 = vunpack.c.l.s8.bf16 %v427
        %v836 = vunpack.c.l.s8.bf16 %v428
        %v837 = vunpack.c.l.s8.bf16 %v429
        %v838 = vunpack.c.l.s8.bf16 %v430
        %v839 = vunpack.c.l.s8.bf16 %v431
        %v840 = vunpack.c.l.s8.bf16 %v432
        %v841 = vunpack.c.l.s8.bf16 %v433
        %v842 = vunpack.c.l.s8.bf16 %v434
        %v843 = vunpack.c.l.s8.bf16 %v435
        %v844 = vunpack.c.l.s8.bf16 %v436
        %v845 = vunpack.c.l.s8.bf16 %v437
        %v846 = vunpack.c.h.s8.bf16 %v426
        %v847 = vunpack.c.h.s8.bf16 %v427
        %v848 = vunpack.c.h.s8.bf16 %v428
        %v849 = vunpack.c.h.s8.bf16 %v429
        %v850 = vunpack.c.h.s8.bf16 %v430
        %v851 = vunpack.c.h.s8.bf16 %v431
        %v852 = vunpack.c.h.s8.bf16 %v432
        %v853 = vunpack.c.h.s8.bf16 %v433
        %v854 = vunpack.c.h.s8.bf16 %v434
        %v855 = vunpack.c.h.s8.bf16 %v435
        %v856 = vunpack.c.h.s8.bf16 %v436
        %v857 = vunpack.c.h.s8.bf16 %v437
        %v858 = vunpack.c.l.s8.bf16 %v438
        %v859 = vunpack.c.l.s8.bf16 %v439
        %v860 = vunpack.c.l.s8.bf16 %v440
        %v861 = vunpack.c.l.s8.bf16 %v441
        %v862 = vunpack.c.l.s8.bf16 %v442
        %v863 = vunpack.c.l.s8.bf16 %v443
        %v864 = vunpack.c.l.s8.bf16 %v444
        %v865 = vunpack.c.l.s8.bf16 %v445
        %v866 = vunpack.c.l.s8.bf16 %v446
        %v867 = vunpack.c.l.s8.bf16 %v447
        %v868 = vunpack.c.l.s8.bf16 %v448
        %v869 = vunpack.c.l.s8.bf16 %v449
        %v870 = vunpack.c.h.s8.bf16 %v438
        %v871 = vunpack.c.h.s8.bf16 %v439
        %v872 = vunpack.c.h.s8.bf16 %v440
        %v873 = vunpack.c.h.s8.bf16 %v441
        %v874 = vunpack.c.h.s8.bf16 %v442
        %v875 = vunpack.c.h.s8.bf16 %v443
        %v876 = vunpack.c.h.s8.bf16 %v444
        %v877 = vunpack.c.h.s8.bf16 %v445
        %v878 = vunpack.c.h.s8.bf16 %v446
        %v879 = vunpack.c.h.s8.bf16 %v447
        %v880 = vunpack.c.h.s8.bf16 %v448
        %v881 = vunpack.c.h.s8.bf16 %v449
        %v882 = vunpack.c.l.s8.bf16 %v450
        %v883 = vunpack.c.l.s8.bf16 %v451
        %v884 = vunpack.c.l.s8.bf16 %v452
        %v885 = vunpack.c.l.s8.bf16 %v453
        %v886 = vunpack.c.l.s8.bf16 %v454
        %v887 = vunpack.c.l.s8.bf16 %v455
        %v888 = vunpack.c.l.s8.bf16 %v456
        %v889 = vunpack.c.l.s8.bf16 %v457
        %v890 = vunpack.c.l.s8.bf16 %v458
        %v891 = vunpack.c.l.s8.bf16 %v459
        %v892 = vunpack.c.l.s8.bf16 %v460
        %v893 = vunpack.c.l.s8.bf16 %v461
        %v894 = vunpack.c.h.s8.bf16 %v450
        %v895 = vunpack.c.h.s8.bf16 %v451
        %v896 = vunpack.c.h.s8.bf16 %v452
        %v897 = vunpack.c.h.s8.bf16 %v453
        %v898 = vunpack.c.h.s8.bf16 %v454
        %v899 = vunpack.c.h.s8.bf16 %v455
        %v900 = vunpack.c.h.s8.bf16 %v456
        %v901 = vunpack.c.h.s8.bf16 %v457
        %v902 = vunpack.c.h.s8.bf16 %v458
        %v903 = vunpack.c.h.s8.bf16 %v459
        %v904 = vunpack.c.h.s8.bf16 %v460
        %v905 = vunpack.c.h.s8.bf16 %v461
        %v906 = vunpack.c.l.s8.bf16 %v462
        %v907 = vunpack.c.l.s8.bf16 %v463
        %v908 = vunpack.c.l.s8.bf16 %v464
        %v909 = vunpack.c.l.s8.bf16 %v465
        %v910 = vunpack.c.l.s8.bf16 %v466
        %v911 = vunpack.c.l.s8.bf16 %v467
        %v912 = vunpack.c.l.s8.bf16 %v468
        %v913 = vunpack.c.l.s8.bf16 %v469
        %v914 = vunpack.c.l.s8.bf16 %v470
        %v915 = vunpack.c.l.s8.bf16 %v471
        %v916 = vunpack.c.l.s8.bf16 %v472
        %v917 = vunpack.c.l.s8.bf16 %v473
        %v918 = vunpack.c.h.s8.bf16 %v462
        %v919 = vunpack.c.h.s8.bf16 %v463
        %v920 = vunpack.c.h.s8.bf16 %v464
        %v921 = vunpack.c.h.s8.bf16 %v465
        %v922 = vunpack.c.h.s8.bf16 %v466
        %v923 = vunpack.c.h.s8.bf16 %v467
        %v924 = vunpack.c.h.s8.bf16 %v468
        %v925 = vunpack.c.h.s8.bf16 %v469
        %v926 = vunpack.c.h.s8.bf16 %v470
        %v927 = vunpack.c.h.s8.bf16 %v471
        %v928 = vunpack.c.h.s8.bf16 %v472
        %v929 = vunpack.c.h.s8.bf16 %v473
        %v930 = vunpack.c.l.s8.bf16 %v474
        %v931 = vunpack.c.l.s8.bf16 %v475
        %v932 = vunpack.c.l.s8.bf16 %v476
        %v933 = vunpack.c.l.s8.bf16 %v477
        %v934 = vunpack.c.l.s8.bf16 %v478
        %v935 = vunpack.c.l.s8.bf16 %v479
        %v936 = vunpack.c.l.s8.bf16 %v480
        %v937 = vunpack.c.l.s8.bf16 %v481
        %v938 = vunpack.c.l.s8.bf16 %v482
        %v939 = vunpack.c.l.s8.bf16 %v483
        %v940 = vunpack.c.l.s8.bf16 %v484
        %v941 = vunpack.c.l.s8.bf16 %v485
        %v942 = vunpack.c.h.s8.bf16 %v474
        %v943 = vunpack.c.h.s8.bf16 %v475
        %v944 = vunpack.c.h.s8.bf16 %v476
        %v945 = vunpack.c.h.s8.bf16 %v477
        %v946 = vunpack.c.h.s8.bf16 %v478
        %v947 = vunpack.c.h.s8.bf16 %v479
        %v948 = vunpack.c.h.s8.bf16 %v480
        %v949 = vunpack.c.h.s8.bf16 %v481
        %v950 = vunpack.c.h.s8.bf16 %v482
        %v951 = vunpack.c.h.s8.bf16 %v483
        %v952 = vunpack.c.h.s8.bf16 %v484
        %v953 = vunpack.c.h.s8.bf16 %v485
        %v954 = vunpack.c.l.s8.bf16 %v486
        %v955 = vunpack.c.l.s8.bf16 %v487
        %v956 = vunpack.c.l.s8.bf16 %v488
        %v957 = vunpack.c.l.s8.bf16 %v489
        %v958 = vunpack.c.l.s8.bf16 %v490
        %v959 = vunpack.c.l.s8.bf16 %v491
        %v960 = vunpack.c.l.s8.bf16 %v492
        %v961 = vunpack.c.l.s8.bf16 %v493
        %v962 = vunpack.c.l.s8.bf16 %v494
        %v963 = vunpack.c.l.s8.bf16 %v495
        %v964 = vunpack.c.l.s8.bf16 %v496
        %v965 = vunpack.c.l.s8.bf16 %v497
        %v966 = vunpack.c.h.s8.bf16 %v486
        %v967 = vunpack.c.h.s8.bf16 %v487
        %v968 = vunpack.c.h.s8.bf16 %v488
        %v969 = vunpack.c.h.s8.bf16 %v489
        %v970 = vunpack.c.h.s8.bf16 %v490
        %v971 = vunpack.c.h.s8.bf16 %v491
        %v972 = vunpack.c.h.s8.bf16 %v492
        %v973 = vunpack.c.h.s8.bf16 %v493
        %v974 = vunpack.c.h.s8.bf16 %v494
        %v975 = vunpack.c.h.s8.bf16 %v495
        %v976 = vunpack.c.h.s8.bf16 %v496
        %v977 = vunpack.c.h.s8.bf16 %v497
        %v978 = vunpack.c.l.s8.bf16 %v498
        %v979 = vunpack.c.l.s8.bf16 %v499
        %v980 = vunpack.c.l.s8.bf16 %v500
        %v981 = vunpack.c.l.s8.bf16 %v501
        %v982 = vunpack.c.l.s8.bf16 %v502
        %v983 = vunpack.c.l.s8.bf16 %v503
        %v984 = vunpack.c.l.s8.bf16 %v504
        %v985 = vunpack.c.l.s8.bf16 %v505
        %v986 = vunpack.c.l.s8.bf16 %v506
        %v987 = vunpack.c.l.s8.bf16 %v507
        %v988 = vunpack.c.l.s8.bf16 %v508
        %v989 = vunpack.c.l.s8.bf16 %v509
        %v990 = vunpack.c.h.s8.bf16 %v498
        %v991 = vunpack.c.h.s8.bf16 %v499
        %v992 = vunpack.c.h.s8.bf16 %v500
        %v993 = vunpack.c.h.s8.bf16 %v501
        %v994 = vunpack.c.h.s8.bf16 %v502
        %v995 = vunpack.c.h.s8.bf16 %v503
        %v996 = vunpack.c.h.s8.bf16 %v504
        %v997 = vunpack.c.h.s8.bf16 %v505
        %v998 = vunpack.c.h.s8.bf16 %v506
        %v999 = vunpack.c.h.s8.bf16 %v507
        %v1000 = vunpack.c.h.s8.bf16 %v508
        %v1001 = vunpack.c.h.s8.bf16 %v509
        %v1002 = vunpack.c.l.s8.bf16 %v510
        %v1003 = vunpack.c.l.s8.bf16 %v511
        %v1004 = vunpack.c.l.s8.bf16 %v512
        %v1005 = vunpack.c.l.s8.bf16 %v513
        %v1006 = vunpack.c.l.s8.bf16 %v514
        %v1007 = vunpack.c.l.s8.bf16 %v515
        %v1008 = vunpack.c.l.s8.bf16 %v516
        %v1009 = vunpack.c.l.s8.bf16 %v517
        %v1010 = vunpack.c.l.s8.bf16 %v518
        %v1011 = vunpack.c.l.s8.bf16 %v519
        %v1012 = vunpack.c.l.s8.bf16 %v520
        %v1013 = vunpack.c.l.s8.bf16 %v521
        %v1014 = vunpack.c.h.s8.bf16 %v510
        %v1015 = vunpack.c.h.s8.bf16 %v511
        %v1016 = vunpack.c.h.s8.bf16 %v512
        %v1017 = vunpack.c.h.s8.bf16 %v513
        %v1018 = vunpack.c.h.s8.bf16 %v514
        %v1019 = vunpack.c.h.s8.bf16 %v515
        %v1020 = vunpack.c.h.s8.bf16 %v516
        %v1021 = vunpack.c.h.s8.bf16 %v517
        %v1022 = vunpack.c.h.s8.bf16 %v518
        %v1023 = vunpack.c.h.s8.bf16 %v519
        %v1024 = vunpack.c.h.s8.bf16 %v520
        %v1025 = vunpack.c.h.s8.bf16 %v521
        %v1026 = vunpack.c.l.s8.bf16 %v522
        %v1027 = vunpack.c.l.s8.bf16 %v523
        %v1028 = vunpack.c.l.s8.bf16 %v524
        %v1029 = vunpack.c.l.s8.bf16 %v525
        %v1030 = vunpack.c.l.s8.bf16 %v526
        %v1031 = vunpack.c.l.s8.bf16 %v527
        %v1032 = vunpack.c.l.s8.bf16 %v528
        %v1033 = vunpack.c.l.s8.bf16 %v529
        %v1034 = vunpack.c.l.s8.bf16 %v530
        %v1035 = vunpack.c.l.s8.bf16 %v531
        %v1036 = vunpack.c.l.s8.bf16 %v532
        %v1037 = vunpack.c.l.s8.bf16 %v533
        %v1038 = vunpack.c.h.s8.bf16 %v522
        %v1039 = vunpack.c.h.s8.bf16 %v523
        %v1040 = vunpack.c.h.s8.bf16 %v524
        %v1041 = vunpack.c.h.s8.bf16 %v525
        %v1042 = vunpack.c.h.s8.bf16 %v526
        %v1043 = vunpack.c.h.s8.bf16 %v527
        %v1044 = vunpack.c.h.s8.bf16 %v528
        %v1045 = vunpack.c.h.s8.bf16 %v529
        %v1046 = vunpack.c.h.s8.bf16 %v530
        %v1047 = vunpack.c.h.s8.bf16 %v531
        %v1048 = vunpack.c.h.s8.bf16 %v532
        %v1049 = vunpack.c.h.s8.bf16 %v533
        %v1050 = vunpack.c.l.s8.bf16 %v534
        %v1051 = vunpack.c.l.s8.bf16 %v535
        %v1052 = vunpack.c.l.s8.bf16 %v536
        %v1053 = vunpack.c.l.s8.bf16 %v537
        %v1054 = vunpack.c.l.s8.bf16 %v538
        %v1055 = vunpack.c.l.s8.bf16 %v539
        %v1056 = vunpack.c.l.s8.bf16 %v540
        %v1057 = vunpack.c.l.s8.bf16 %v541
        %v1058 = vunpack.c.l.s8.bf16 %v542
        %v1059 = vunpack.c.l.s8.bf16 %v543
        %v1060 = vunpack.c.l.s8.bf16 %v544
        %v1061 = vunpack.c.l.s8.bf16 %v545
        %v1062 = vunpack.c.h.s8.bf16 %v534
        %v1063 = vunpack.c.h.s8.bf16 %v535
        %v1064 = vunpack.c.h.s8.bf16 %v536
        %v1065 = vunpack.c.h.s8.bf16 %v537
        %v1066 = vunpack.c.h.s8.bf16 %v538
        %v1067 = vunpack.c.h.s8.bf16 %v539
        %v1068 = vunpack.c.h.s8.bf16 %v540
        %v1069 = vunpack.c.h.s8.bf16 %v541
        %v1070 = vunpack.c.h.s8.bf16 %v542
        %v1071 = vunpack.c.h.s8.bf16 %v543
        %v1072 = vunpack.c.h.s8.bf16 %v544
        %v1073 = vunpack.c.h.s8.bf16 %v545
        %v1074 = vunpack.c.l.s8.bf16 %v546
        %v1075 = vunpack.c.l.s8.bf16 %v547
        %v1076 = vunpack.c.l.s8.bf16 %v548
        %v1077 = vunpack.c.l.s8.bf16 %v549
        %v1078 = vunpack.c.l.s8.bf16 %v550
        %v1079 = vunpack.c.l.s8.bf16 %v551
        %v1080 = vunpack.c.l.s8.bf16 %v552
        %v1081 = vunpack.c.l.s8.bf16 %v553
        %v1082 = vunpack.c.l.s8.bf16 %v554
        %v1083 = vunpack.c.l.s8.bf16 %v555
        %v1084 = vunpack.c.l.s8.bf16 %v556
        %v1085 = vunpack.c.l.s8.bf16 %v557
        %v1086 = vunpack.c.h.s8.bf16 %v546
        %v1087 = vunpack.c.h.s8.bf16 %v547
        %v1088 = vunpack.c.h.s8.bf16 %v548
        %v1089 = vunpack.c.h.s8.bf16 %v549
        %v1090 = vunpack.c.h.s8.bf16 %v550
        %v1091 = vunpack.c.h.s8.bf16 %v551
        %v1092 = vunpack.c.h.s8.bf16 %v552
        %v1093 = vunpack.c.h.s8.bf16 %v553
        %v1094 = vunpack.c.h.s8.bf16 %v554
        %v1095 = vunpack.c.h.s8.bf16 %v555
        %v1096 = vunpack.c.h.s8.bf16 %v556
        %v1097 = vunpack.c.h.s8.bf16 %v557
        %v1098 = vunpack.c.l.s8.bf16 %v558
        %v1099 = vunpack.c.l.s8.bf16 %v559
        %v1100 = vunpack.c.l.s8.bf16 %v560
        %v1101 = vunpack.c.l.s8.bf16 %v561
        %v1102 = vunpack.c.l.s8.bf16 %v562
        %v1103 = vunpack.c.l.s8.bf16 %v563
        %v1104 = vunpack.c.l.s8.bf16 %v564
        %v1105 = vunpack.c.l.s8.bf16 %v565
        %v1106 = vunpack.c.l.s8.bf16 %v566
        %v1107 = vunpack.c.l.s8.bf16 %v567
        %v1108 = vunpack.c.l.s8.bf16 %v568
        %v1109 = vunpack.c.l.s8.bf16 %v569
        %v1110 = vunpack.c.h.s8.bf16 %v558
        %v1111 = vunpack.c.h.s8.bf16 %v559
        %v1112 = vunpack.c.h.s8.bf16 %v560
        %v1113 = vunpack.c.h.s8.bf16 %v561
        %v1114 = vunpack.c.h.s8.bf16 %v562
        %v1115 = vunpack.c.h.s8.bf16 %v563
        %v1116 = vunpack.c.h.s8.bf16 %v564
        %v1117 = vunpack.c.h.s8.bf16 %v565
        %v1118 = vunpack.c.h.s8.bf16 %v566
        %v1119 = vunpack.c.h.s8.bf16 %v567
        %v1120 = vunpack.c.h.s8.bf16 %v568
        %v1121 = vunpack.c.h.s8.bf16 %v569
        %v1122 = vunpack.c.l.s8.bf16 %v570
        %v1123 = vunpack.c.l.s8.bf16 %v571
        %v1124 = vunpack.c.l.s8.bf16 %v572
        %v1125 = vunpack.c.l.s8.bf16 %v573
        %v1126 = vunpack.c.l.s8.bf16 %v574
        %v1127 = vunpack.c.l.s8.bf16 %v575
        %v1128 = vunpack.c.l.s8.bf16 %v576
        %v1129 = vunpack.c.l.s8.bf16 %v577
        %v1130 = vunpack.c.l.s8.bf16 %v578
        %v1131 = vunpack.c.l.s8.bf16 %v579
        %v1132 = vunpack.c.l.s8.bf16 %v580
        %v1133 = vunpack.c.l.s8.bf16 %v581
        %v1134 = vunpack.c.h.s8.bf16 %v570
        %v1135 = vunpack.c.h.s8.bf16 %v571
        %v1136 = vunpack.c.h.s8.bf16 %v572
        %v1137 = vunpack.c.h.s8.bf16 %v573
        %v1138 = vunpack.c.h.s8.bf16 %v574
        %v1139 = vunpack.c.h.s8.bf16 %v575
        %v1140 = vunpack.c.h.s8.bf16 %v576
        %v1141 = vunpack.c.h.s8.bf16 %v577
        %v1142 = vunpack.c.h.s8.bf16 %v578
        %v1143 = vunpack.c.h.s8.bf16 %v579
        %v1144 = vunpack.c.h.s8.bf16 %v580
        %v1145 = vunpack.c.h.s8.bf16 %v581
        %v1146 = vunpack.c.l.s8.bf16 %v582
        %v1147 = vunpack.c.l.s8.bf16 %v583
        %v1148 = vunpack.c.l.s8.bf16 %v584
        %v1149 = vunpack.c.l.s8.bf16 %v585
        %v1150 = vunpack.c.l.s8.bf16 %v586
        %v1151 = vunpack.c.l.s8.bf16 %v587
        %v1152 = vunpack.c.l.s8.bf16 %v588
        %v1153 = vunpack.c.l.s8.bf16 %v589
        %v1154 = vunpack.c.l.s8.bf16 %v590
        %v1155 = vunpack.c.l.s8.bf16 %v591
        %v1156 = vunpack.c.l.s8.bf16 %v592
        %v1157 = vunpack.c.l.s8.bf16 %v593
        %v1158 = vunpack.c.h.s8.bf16 %v582
        %v1159 = vunpack.c.h.s8.bf16 %v583
        %v1160 = vunpack.c.h.s8.bf16 %v584
        %v1161 = vunpack.c.h.s8.bf16 %v585
        %v1162 = vunpack.c.h.s8.bf16 %v586
        %v1163 = vunpack.c.h.s8.bf16 %v587
        %v1164 = vunpack.c.h.s8.bf16 %v588
        %v1165 = vunpack.c.h.s8.bf16 %v589
        %v1166 = vunpack.c.h.s8.bf16 %v590
        %v1167 = vunpack.c.h.s8.bf16 %v591
        %v1168 = vunpack.c.h.s8.bf16 %v592
        %v1169 = vunpack.c.h.s8.bf16 %v593
        %v1170 = vld [vmem:[#allocation2] sm:$0x3f]
        %v1172 = vlaneseq
        %v1173 = vshrl.u32 %v1172, 7
        %v1174 = vsub.s32 0, %v1173
        %v1175 = vrot.slane %v1170, %v1174
        %v1176 = vlaneseq
        %v1177 = vshrl.u32 %v1176, 7
        %v1178 = vsub.s32 1, %v1177
        %v1179 = vrot.slane %v1170, %v1178
        %v1180 = vlaneseq
        %v1181 = vshrl.u32 %v1180, 7
        %v1182 = vsub.s32 2, %v1181
        %v1183 = vrot.slane %v1170, %v1182
        %v1184 = vlaneseq
        %v1185 = vshrl.u32 %v1184, 7
        %v1186 = vsub.s32 3, %v1185
        %v1187 = vrot.slane %v1170, %v1186
        %v1188 = vlaneseq
        %v1189 = vshrl.u32 %v1188, 7
        %v1190 = vsub.s32 4, %v1189
        %v1191 = vrot.slane %v1170, %v1190
        %v1192 = vlaneseq
        %v1193 = vshrl.u32 %v1192, 7
        %v1194 = vsub.s32 5, %v1193
        %v1195 = vrot.slane %v1170, %v1194
        %v1202 = vpack.c.bf16 %v1175, %v1175
        %v1203 = vpack.c.bf16 %v1179, %v1179
        %v1204 = vpack.c.bf16 %v1183, %v1183
        %v1205 = vpack.c.bf16 %v1187, %v1187
        %v1206 = vpack.c.bf16 %v1191, %v1191
        %v1207 = vpack.c.bf16 %v1195, %v1195
        %1208 = vmatprep.subr.bf16.mxu0 %v595
        %1209 = vmatpush1.bf16.msra.mxu0 %v594
        %1210 = vmatprep.subr.bf16.mxu0 %v607
        %1211 = vmatpush1.bf16.msra.mxu0 %v606
        %1212 = vmatprep.subr.bf16.mxu0 %v619
        %1213 = vmatpush1.bf16.msra.mxu0 %v618
        %1214 = vmatprep.subr.bf16.mxu0 %v631
        %1215 = vmatpush1.bf16.msra.mxu0 %v630
        %1216 = vmatprep.subr.bf16.mxu0 %v643
        %1217 = vmatpush1.bf16.msra.mxu0 %v642
        %1218 = vmatprep.subr.bf16.mxu0 %v655
        %1219 = vmatpush1.bf16.msra.mxu0 %v654
        %1220 = vmatprep.subr.bf16.mxu0 %v667
        %1221 = vmatpush1.bf16.msra.mxu0 %v666
        %1222 = vmatprep.subr.bf16.mxu0 %v679
        %1223 = vmatpush1.bf16.msra.mxu0 %v678
        %1224 = vmatprep.subr.bf16.mxu0 %v691
        %1225 = vmatpush1.bf16.msra.mxu0 %v690
        %1226 = vmatprep.subr.bf16.mxu0 %v703
        %1227 = vmatpush1.bf16.msra.mxu0 %v702
        %1228 = vmatprep.subr.bf16.mxu0 %v715
        %1229 = vmatpush1.bf16.msra.mxu0 %v714
        %1230 = vmatprep.subr.bf16.mxu0 %v727
        %1231 = vmatpush1.bf16.msra.mxu0 %v726
        %1232 = vmatprep.subr.bf16.mxu0 %v739
        %1233 = vmatpush1.bf16.msra.mxu0 %v738
        %1234 = vmatprep.subr.bf16.mxu0 %v751
        %1235 = vmatpush1.bf16.msra.mxu0 %v750
        %1236 = vmatprep.subr.bf16.mxu0 %v763
        %1237 = vmatpush1.bf16.msra.mxu0 %v762
        %1238 = vmatprep.subr.bf16.mxu0 %v775
        %1239 = vmatpush1.bf16.msra.mxu0 %v774
        %1240 = vmatprep.mubr.bf16.mxu0 %v1203
        %1241 = vmatmul.mubr.bf16.gmra.mrb[0].mxu0 %v1202
        %v1242 = vpop.f32.mrb[0].mxu0
        %v1243 = vadd.f32 0.0, %v1242
        %v1244 = vpop.f32.mrb[0].mxu0
        %v1245 = vadd.f32 0.0, %v1244
        %v1246 = vpop.f32.mrb[0].mxu0
        %v1247 = vpop.f32.mrb[0].mxu0
        %1248 = vdwg.mxu0
        %1249 = vmatprep.subr.bf16.mxu0 %v787
        %1250 = vmatpush1.bf16.msra.mxu0 %v786
        %1251 = vmatprep.subr.bf16.mxu0 %v799
        %1252 = vmatpush1.bf16.msra.mxu0 %v798
        %1253 = vmatprep.subr.bf16.mxu0 %v811
        %1254 = vmatpush1.bf16.msra.mxu0 %v810
        %1255 = vmatprep.subr.bf16.mxu0 %v823
        %1256 = vmatpush1.bf16.msra.mxu0 %v822
        %1257 = vmatprep.subr.bf16.mxu0 %v835
        %1258 = vmatpush1.bf16.msra.mxu0 %v834
        %1259 = vmatprep.subr.bf16.mxu0 %v847
        %1260 = vmatpush1.bf16.msra.mxu0 %v846
        %1261 = vmatprep.subr.bf16.mxu0 %v859
        %1262 = vmatpush1.bf16.msra.mxu0 %v858
        %1263 = vmatprep.subr.bf16.mxu0 %v871
        %1264 = vmatpush1.bf16.msra.mxu0 %v870
        %1265 = vmatprep.subr.bf16.mxu0 %v883
        %1266 = vmatpush1.bf16.msra.mxu0 %v882
        %1267 = vmatprep.subr.bf16.mxu0 %v895
        %1268 = vmatpush1.bf16.msra.mxu0 %v894
        %1269 = vmatprep.subr.bf16.mxu0 %v907
        %1270 = vmatpush1.bf16.msra.mxu0 %v906
        %1271 = vmatprep.subr.bf16.mxu0 %v919
        %1272 = vmatpush1.bf16.msra.mxu0 %v918
        %1273 = vmatprep.subr.bf16.mxu0 %v931
        %1274 = vmatpush1.bf16.msra.mxu0 %v930
        %1275 = vmatprep.subr.bf16.mxu0 %v943
        %1276 = vmatpush1.bf16.msra.mxu0 %v942
        %1277 = vmatprep.subr.bf16.mxu0 %v955
        %1278 = vmatpush1.bf16.msra.mxu0 %v954
        %1279 = vmatprep.subr.bf16.mxu0 %v967
        %1280 = vmatpush1.bf16.msra.mxu0 %v966
        %1281 = vmatprep.mubr.bf16.mxu0 %v1205
        %1282 = vmatmul.mubr.bf16.gmra.mrb[0].mxu0 %v1204
        %v1283 = vpop.f32.mrb[0].mxu0
        %v1284 = vadd.f32 %v1243, %v1283
        %v1285 = vpop.f32.mrb[0].mxu0
        %v1286 = vadd.f32 %v1245, %v1285
        %v1287 = vpop.f32.mrb[0].mxu0
        %v1288 = vpop.f32.mrb[0].mxu0
        %1289 = vdwg.mxu0
        %1290 = vmatprep.subr.bf16.mxu0 %v979
        %1291 = vmatpush1.bf16.msra.mxu0 %v978
        %1292 = vmatprep.subr.bf16.mxu0 %v991
        %1293 = vmatpush1.bf16.msra.mxu0 %v990
        %1294 = vmatprep.subr.bf16.mxu0 %v1003
        %1295 = vmatpush1.bf16.msra.mxu0 %v1002
        %1296 = vmatprep.subr.bf16.mxu0 %v1015
        %1297 = vmatpush1.bf16.msra.mxu0 %v1014
        %1298 = vmatprep.subr.bf16.mxu0 %v1027
        %1299 = vmatpush1.bf16.msra.mxu0 %v1026
        %1300 = vmatprep.subr.bf16.mxu0 %v1039
        %1301 = vmatpush1.bf16.msra.mxu0 %v1038
        %1302 = vmatprep.subr.bf16.mxu0 %v1051
        %1303 = vmatpush1.bf16.msra.mxu0 %v1050
        %1304 = vmatprep.subr.bf16.mxu0 %v1063
        %1305 = vmatpush1.bf16.msra.mxu0 %v1062
        %1306 = vmatprep.subr.bf16.mxu0 %v1075
        %1307 = vmatpush1.bf16.msra.mxu0 %v1074
        %1308 = vmatprep.subr.bf16.mxu0 %v1087
        %1309 = vmatpush1.bf16.msra.mxu0 %v1086
        %1310 = vmatprep.subr.bf16.mxu0 %v1099
        %1311 = vmatpush1.bf16.msra.mxu0 %v1098
        %1312 = vmatprep.subr.bf16.mxu0 %v1111
        %1313 = vmatpush1.bf16.msra.mxu0 %v1110
        %1314 = vmatprep.subr.bf16.mxu0 %v1123
        %1315 = vmatpush1.bf16.msra.mxu0 %v1122
        %1316 = vmatprep.subr.bf16.mxu0 %v1135
        %1317 = vmatpush1.bf16.msra.mxu0 %v1134
        %1318 = vmatprep.subr.bf16.mxu0 %v1147
        %1319 = vmatpush1.bf16.msra.mxu0 %v1146
        %1320 = vmatprep.subr.bf16.mxu0 %v1159
        %1321 = vmatpush1.bf16.msra.mxu0 %v1158
        %1322 = vmatprep.mubr.bf16.mxu0 %v1207
        %1323 = vmatmul.mubr.bf16.gmra.mrb[0].mxu0 %v1206
        %v1324 = vpop.f32.mrb[0].mxu0
        %v1325 = vadd.f32 %v1284, %v1324
        %v1326 = vpop.f32.mrb[0].mxu0
        %v1327 = vadd.f32 %v1286, %v1326
        %v1328 = vpop.f32.mrb[0].mxu0
        %v1329 = vpop.f32.mrb[0].mxu0
        %1330 = vdwg.mxu0
        %1331 = vmatprep.subr.bf16.mxu0 %v597
        %1332 = vmatpush1.bf16.msra.mxu0 %v596
        %1333 = vmatprep.subr.bf16.mxu0 %v609
        %1334 = vmatpush1.bf16.msra.mxu0 %v608
        %1335 = vmatprep.subr.bf16.mxu0 %v621
        %1336 = vmatpush1.bf16.msra.mxu0 %v620
        %1337 = vmatprep.subr.bf16.mxu0 %v633
        %1338 = vmatpush1.bf16.msra.mxu0 %v632
        %1339 = vmatprep.subr.bf16.mxu0 %v645
        %1340 = vmatpush1.bf16.msra.mxu0 %v644
        %1341 = vmatprep.subr.bf16.mxu0 %v657
        %1342 = vmatpush1.bf16.msra.mxu0 %v656
        %1343 = vmatprep.subr.bf16.mxu0 %v669
        %1344 = vmatpush1.bf16.msra.mxu0 %v668
        %1345 = vmatprep.subr.bf16.mxu0 %v681
        %1346 = vmatpush1.bf16.msra.mxu0 %v680
        %1347 = vmatprep.subr.bf16.mxu0 %v693
        %1348 = vmatpush1.bf16.msra.mxu0 %v692
        %1349 = vmatprep.subr.bf16.mxu0 %v705
        %1350 = vmatpush1.bf16.msra.mxu0 %v704
        %1351 = vmatprep.subr.bf16.mxu0 %v717
        %1352 = vmatpush1.bf16.msra.mxu0 %v716
        %1353 = vmatprep.subr.bf16.mxu0 %v729
        %1354 = vmatpush1.bf16.msra.mxu0 %v728
        %1355 = vmatprep.subr.bf16.mxu0 %v741
        %1356 = vmatpush1.bf16.msra.mxu0 %v740
        %1357 = vmatprep.subr.bf16.mxu0 %v753
        %1358 = vmatpush1.bf16.msra.mxu0 %v752
        %1359 = vmatprep.subr.bf16.mxu0 %v765
        %1360 = vmatpush1.bf16.msra.mxu0 %v764
        %1361 = vmatprep.subr.bf16.mxu0 %v777
        %1362 = vmatpush1.bf16.msra.mxu0 %v776
        %1363 = vmatprep.mubr.bf16.mxu0 %v1203
        %1364 = vmatmul.mubr.bf16.gmra.mrb[0].mxu0 %v1202
        %v1365 = vpop.f32.mrb[0].mxu0
        %v1366 = vadd.f32 0.0, %v1365
        %v1367 = vpop.f32.mrb[0].mxu0
        %v1368 = vadd.f32 0.0, %v1367
        %v1369 = vpop.f32.mrb[0].mxu0
        %v1370 = vpop.f32.mrb[0].mxu0
        %1371 = vdwg.mxu0
        %1372 = vmatprep.subr.bf16.mxu0 %v789
        %1373 = vmatpush1.bf16.msra.mxu0 %v788
        %1374 = vmatprep.subr.bf16.mxu0 %v801
        %1375 = vmatpush1.bf16.msra.mxu0 %v800
        %1376 = vmatprep.subr.bf16.mxu0 %v813
        %1377 = vmatpush1.bf16.msra.mxu0 %v812
        %1378 = vmatprep.subr.bf16.mxu0 %v825
        %1379 = vmatpush1.bf16.msra.mxu0 %v824
        %1380 = vmatprep.subr.bf16.mxu0 %v837
        %1381 = vmatpush1.bf16.msra.mxu0 %v836
        %1382 = vmatprep.subr.bf16.mxu0 %v849
        %1383 = vmatpush1.bf16.msra.mxu0 %v848
        %1384 = vmatprep.subr.bf16.mxu0 %v861
        %1385 = vmatpush1.bf16.msra.mxu0 %v860
        %1386 = vmatprep.subr.bf16.mxu0 %v873
        %1387 = vmatpush1.bf16.msra.mxu0 %v872
        %1388 = vmatprep.subr.bf16.mxu0 %v885
        %1389 = vmatpush1.bf16.msra.mxu0 %v884
        %1390 = vmatprep.subr.bf16.mxu0 %v897
        %1391 = vmatpush1.bf16.msra.mxu0 %v896
        %1392 = vmatprep.subr.bf16.mxu0 %v909
        %1393 = vmatpush1.bf16.msra.mxu0 %v908
        %1394 = vmatprep.subr.bf16.mxu0 %v921
        %1395 = vmatpush1.bf16.msra.mxu0 %v920
        %1396 = vmatprep.subr.bf16.mxu0 %v933
        %1397 = vmatpush1.bf16.msra.mxu0 %v932
        %1398 = vmatprep.subr.bf16.mxu0 %v945
        %1399 = vmatpush1.bf16.msra.mxu0 %v944
        %1400 = vmatprep.subr.bf16.mxu0 %v957
        %1401 = vmatpush1.bf16.msra.mxu0 %v956
        %1402 = vmatprep.subr.bf16.mxu0 %v969
        %1403 = vmatpush1.bf16.msra.mxu0 %v968
        %1404 = vmatprep.mubr.bf16.mxu0 %v1205
        %1405 = vmatmul.mubr.bf16.gmra.mrb[0].mxu0 %v1204
        %v1406 = vpop.f32.mrb[0].mxu0
        %v1407 = vadd.f32 %v1366, %v1406
        %v1408 = vpop.f32.mrb[0].mxu0
        %v1409 = vadd.f32 %v1368, %v1408
        %v1410 = vpop.f32.mrb[0].mxu0
        %v1411 = vpop.f32.mrb[0].mxu0
        %1412 = vdwg.mxu0
        %1413 = vmatprep.subr.bf16.mxu0 %v981
        %1414 = vmatpush1.bf16.msra.mxu0 %v980
        %1415 = vmatprep.subr.bf16.mxu0 %v993
        %1416 = vmatpush1.bf16.msra.mxu0 %v992
        %1417 = vmatprep.subr.bf16.mxu0 %v1005
        %1418 = vmatpush1.bf16.msra.mxu0 %v1004
        %1419 = vmatprep.subr.bf16.mxu0 %v1017
        %1420 = vmatpush1.bf16.msra.mxu0 %v1016
        %1421 = vmatprep.subr.bf16.mxu0 %v1029
        %1422 = vmatpush1.bf16.msra.mxu0 %v1028
        %1423 = vmatprep.subr.bf16.mxu0 %v1041
        %1424 = vmatpush1.bf16.msra.mxu0 %v1040
        %1425 = vmatprep.subr.bf16.mxu0 %v1053
        %1426 = vmatpush1.bf16.msra.mxu0 %v1052
        %1427 = vmatprep.subr.bf16.mxu0 %v1065
        %1428 = vmatpush1.bf16.msra.mxu0 %v1064
        %1429 = vmatprep.subr.bf16.mxu0 %v1077
        %1430 = vmatpush1.bf16.msra.mxu0 %v1076
        %1431 = vmatprep.subr.bf16.mxu0 %v1089
        %1432 = vmatpush1.bf16.msra.mxu0 %v1088
        %1433 = vmatprep.subr.bf16.mxu0 %v1101
        %1434 = vmatpush1.bf16.msra.mxu0 %v1100
        %1435 = vmatprep.subr.bf16.mxu0 %v1113
        %1436 = vmatpush1.bf16.msra.mxu0 %v1112
        %1437 = vmatprep.subr.bf16.mxu0 %v1125
        %1438 = vmatpush1.bf16.msra.mxu0 %v1124
        %1439 = vmatprep.subr.bf16.mxu0 %v1137
        %1440 = vmatpush1.bf16.msra.mxu0 %v1136
        %1441 = vmatprep.subr.bf16.mxu0 %v1149
        %1442 = vmatpush1.bf16.msra.mxu0 %v1148
        %1443 = vmatprep.subr.bf16.mxu0 %v1161
        %1444 = vmatpush1.bf16.msra.mxu0 %v1160
        %1445 = vmatprep.mubr.bf16.mxu0 %v1207
        %1446 = vmatmul.mubr.bf16.gmra.mrb[0].mxu0 %v1206
        %v1447 = vpop.f32.mrb[0].mxu0
        %v1448 = vadd.f32 %v1407, %v1447
        %v1449 = vpop.f32.mrb[0].mxu0
        %v1450 = vadd.f32 %v1409, %v1449
        %v1451 = vpop.f32.mrb[0].mxu0
        %v1452 = vpop.f32.mrb[0].mxu0
        %1453 = vdwg.mxu0
        %1454 = vmatprep.subr.bf16.mxu0 %v599
        %1455 = vmatpush1.bf16.msra.mxu0 %v598
        %1456 = vmatprep.subr.bf16.mxu0 %v611
        %1457 = vmatpush1.bf16.msra.mxu0 %v610
        %1458 = vmatprep.subr.bf16.mxu0 %v623
        %1459 = vmatpush1.bf16.msra.mxu0 %v622
        %1460 = vmatprep.subr.bf16.mxu0 %v635
        %1461 = vmatpush1.bf16.msra.mxu0 %v634
        %1462 = vmatprep.subr.bf16.mxu0 %v647
        %1463 = vmatpush1.bf16.msra.mxu0 %v646
        %1464 = vmatprep.subr.bf16.mxu0 %v659
        %1465 = vmatpush1.bf16.msra.mxu0 %v658
        %1466 = vmatprep.subr.bf16.mxu0 %v671
        %1467 = vmatpush1.bf16.msra.mxu0 %v670
        %1468 = vmatprep.subr.bf16.mxu0 %v683
        %1469 = vmatpush1.bf16.msra.mxu0 %v682
        %1470 = vmatprep.subr.bf16.mxu0 %v695
        %1471 = vmatpush1.bf16.msra.mxu0 %v694
        %1472 = vmatprep.subr.bf16.mxu0 %v707
        %1473 = vmatpush1.bf16.msra.mxu0 %v706
        %1474 = vmatprep.subr.bf16.mxu0 %v719
        %1475 = vmatpush1.bf16.msra.mxu0 %v718
        %1476 = vmatprep.subr.bf16.mxu0 %v731
        %1477 = vmatpush1.bf16.msra.mxu0 %v730
        %1478 = vmatprep.subr.bf16.mxu0 %v743
        %1479 = vmatpush1.bf16.msra.mxu0 %v742
        %1480 = vmatprep.subr.bf16.mxu0 %v755
        %1481 = vmatpush1.bf16.msra.mxu0 %v754
        %1482 = vmatprep.subr.bf16.mxu0 %v767
        %1483 = vmatpush1.bf16.msra.mxu0 %v766
        %1484 = vmatprep.subr.bf16.mxu0 %v779
        %1485 = vmatpush1.bf16.msra.mxu0 %v778
        %1486 = vmatprep.mubr.bf16.mxu0 %v1203
        %1487 = vmatmul.mubr.bf16.gmra.mrb[0].mxu0 %v1202
        %v1488 = vpop.f32.mrb[0].mxu0
        %v1489 = vadd.f32 0.0, %v1488
        %v1490 = vpop.f32.mrb[0].mxu0
        %v1491 = vadd.f32 0.0, %v1490
        %v1492 = vpop.f32.mrb[0].mxu0
        %v1493 = vpop.f32.mrb[0].mxu0
        %1494 = vdwg.mxu0
        %1495 = vmatprep.subr.bf16.mxu0 %v791
        %1496 = vmatpush1.bf16.msra.mxu0 %v790
        %1497 = vmatprep.subr.bf16.mxu0 %v803
        %1498 = vmatpush1.bf16.msra.mxu0 %v802
        %1499 = vmatprep.subr.bf16.mxu0 %v815
        %1500 = vmatpush1.bf16.msra.mxu0 %v814
        %1501 = vmatprep.subr.bf16.mxu0 %v827
        %1502 = vmatpush1.bf16.msra.mxu0 %v826
        %1503 = vmatprep.subr.bf16.mxu0 %v839
        %1504 = vmatpush1.bf16.msra.mxu0 %v838
        %1505 = vmatprep.subr.bf16.mxu0 %v851
        %1506 = vmatpush1.bf16.msra.mxu0 %v850
        %1507 = vmatprep.subr.bf16.mxu0 %v863
        %1508 = vmatpush1.bf16.msra.mxu0 %v862
        %1509 = vmatprep.subr.bf16.mxu0 %v875
        %1510 = vmatpush1.bf16.msra.mxu0 %v874
        %1511 = vmatprep.subr.bf16.mxu0 %v887
        %1512 = vmatpush1.bf16.msra.mxu0 %v886
        %1513 = vmatprep.subr.bf16.mxu0 %v899
        %1514 = vmatpush1.bf16.msra.mxu0 %v898
        %1515 = vmatprep.subr.bf16.mxu0 %v911
        %1516 = vmatpush1.bf16.msra.mxu0 %v910
        %1517 = vmatprep.subr.bf16.mxu0 %v923
        %1518 = vmatpush1.bf16.msra.mxu0 %v922
        %1519 = vmatprep.subr.bf16.mxu0 %v935
        %1520 = vmatpush1.bf16.msra.mxu0 %v934
        %1521 = vmatprep.subr.bf16.mxu0 %v947
        %1522 = vmatpush1.bf16.msra.mxu0 %v946
        %1523 = vmatprep.subr.bf16.mxu0 %v959
        %1524 = vmatpush1.bf16.msra.mxu0 %v958
        %1525 = vmatprep.subr.bf16.mxu0 %v971
        %1526 = vmatpush1.bf16.msra.mxu0 %v970
        %1527 = vmatprep.mubr.bf16.mxu0 %v1205
        %1528 = vmatmul.mubr.bf16.gmra.mrb[0].mxu0 %v1204
        %v1529 = vpop.f32.mrb[0].mxu0
        %v1530 = vadd.f32 %v1489, %v1529
        %v1531 = vpop.f32.mrb[0].mxu0
        %v1532 = vadd.f32 %v1491, %v1531
        %v1533 = vpop.f32.mrb[0].mxu0
        %v1534 = vpop.f32.mrb[0].mxu0
        %1535 = vdwg.mxu0
        %1536 = vmatprep.subr.bf16.mxu0 %v983
        %1537 = vmatpush1.bf16.msra.mxu0 %v982
        %1538 = vmatprep.subr.bf16.mxu0 %v995
        %1539 = vmatpush1.bf16.msra.mxu0 %v994
        %1540 = vmatprep.subr.bf16.mxu0 %v1007
        %1541 = vmatpush1.bf16.msra.mxu0 %v1006
        %1542 = vmatprep.subr.bf16.mxu0 %v1019
        %1543 = vmatpush1.bf16.msra.mxu0 %v1018
        %1544 = vmatprep.subr.bf16.mxu0 %v1031
        %1545 = vmatpush1.bf16.msra.mxu0 %v1030
        %1546 = vmatprep.subr.bf16.mxu0 %v1043
        %1547 = vmatpush1.bf16.msra.mxu0 %v1042
        %1548 = vmatprep.subr.bf16.mxu0 %v1055
        %1549 = vmatpush1.bf16.msra.mxu0 %v1054
        %1550 = vmatprep.subr.bf16.mxu0 %v1067
        %1551 = vmatpush1.bf16.msra.mxu0 %v1066
        %1552 = vmatprep.subr.bf16.mxu0 %v1079
        %1553 = vmatpush1.bf16.msra.mxu0 %v1078
        %1554 = vmatprep.subr.bf16.mxu0 %v1091
        %1555 = vmatpush1.bf16.msra.mxu0 %v1090
        %1556 = vmatprep.subr.bf16.mxu0 %v1103
        %1557 = vmatpush1.bf16.msra.mxu0 %v1102
        %1558 = vmatprep.subr.bf16.mxu0 %v1115
        %1559 = vmatpush1.bf16.msra.mxu0 %v1114
        %1560 = vmatprep.subr.bf16.mxu0 %v1127
        %1561 = vmatpush1.bf16.msra.mxu0 %v1126
        %1562 = vmatprep.subr.bf16.mxu0 %v1139
        %1563 = vmatpush1.bf16.msra.mxu0 %v1138
        %1564 = vmatprep.subr.bf16.mxu0 %v1151
        %1565 = vmatpush1.bf16.msra.mxu0 %v1150
        %1566 = vmatprep.subr.bf16.mxu0 %v1163
        %1567 = vmatpush1.bf16.msra.mxu0 %v1162
        %1568 = vmatprep.mubr.bf16.mxu0 %v1207
        %1569 = vmatmul.mubr.bf16.gmra.mrb[0].mxu0 %v1206
        %v1570 = vpop.f32.mrb[0].mxu0
        %v1571 = vadd.f32 %v1530, %v1570
        %v1572 = vpop.f32.mrb[0].mxu0
        %v1573 = vadd.f32 %v1532, %v1572
        %v1574 = vpop.f32.mrb[0].mxu0
        %v1575 = vpop.f32.mrb[0].mxu0
        %1576 = vdwg.mxu0
        %1577 = vmatprep.subr.bf16.mxu0 %v601
        %1578 = vmatpush1.bf16.msra.mxu0 %v600
        %1579 = vmatprep.subr.bf16.mxu0 %v613
        %1580 = vmatpush1.bf16.msra.mxu0 %v612
        %1581 = vmatprep.subr.bf16.mxu0 %v625
        %1582 = vmatpush1.bf16.msra.mxu0 %v624
        %1583 = vmatprep.subr.bf16.mxu0 %v637
        %1584 = vmatpush1.bf16.msra.mxu0 %v636
        %1585 = vmatprep.subr.bf16.mxu0 %v649
        %1586 = vmatpush1.bf16.msra.mxu0 %v648
        %1587 = vmatprep.subr.bf16.mxu0 %v661
        %1588 = vmatpush1.bf16.msra.mxu0 %v660
        %1589 = vmatprep.subr.bf16.mxu0 %v673
        %1590 = vmatpush1.bf16.msra.mxu0 %v672
        %1591 = vmatprep.subr.bf16.mxu0 %v685
        %1592 = vmatpush1.bf16.msra.mxu0 %v684
        %1593 = vmatprep.subr.bf16.mxu0 %v697
        %1594 = vmatpush1.bf16.msra.mxu0 %v696
        %1595 = vmatprep.subr.bf16.mxu0 %v709
        %1596 = vmatpush1.bf16.msra.mxu0 %v708
        %1597 = vmatprep.subr.bf16.mxu0 %v721
        %1598 = vmatpush1.bf16.msra.mxu0 %v720
        %1599 = vmatprep.subr.bf16.mxu0 %v733
        %1600 = vmatpush1.bf16.msra.mxu0 %v732
        %1601 = vmatprep.subr.bf16.mxu0 %v745
        %1602 = vmatpush1.bf16.msra.mxu0 %v744
        %1603 = vmatprep.subr.bf16.mxu0 %v757
        %1604 = vmatpush1.bf16.msra.mxu0 %v756
        %1605 = vmatprep.subr.bf16.mxu0 %v769
        %1606 = vmatpush1.bf16.msra.mxu0 %v768
        %1607 = vmatprep.subr.bf16.mxu0 %v781
        %1608 = vmatpush1.bf16.msra.mxu0 %v780
        %1609 = vmatprep.mubr.bf16.mxu0 %v1203
        %1610 = vmatmul.mubr.bf16.gmra.mrb[0].mxu0 %v1202
        %v1611 = vpop.f32.mrb[0].mxu0
        %v1612 = vadd.f32 0.0, %v1611
        %v1613 = vpop.f32.mrb[0].mxu0
        %v1614 = vadd.f32 0.0, %v1613
        %v1615 = vpop.f32.mrb[0].mxu0
        %v1616 = vpop.f32.mrb[0].mxu0
        %1617 = vdwg.mxu0
        %1618 = vmatprep.subr.bf16.mxu0 %v793
        %1619 = vmatpush1.bf16.msra.mxu0 %v792
        %1620 = vmatprep.subr.bf16.mxu0 %v805
        %1621 = vmatpush1.bf16.msra.mxu0 %v804
        %1622 = vmatprep.subr.bf16.mxu0 %v817
        %1623 = vmatpush1.bf16.msra.mxu0 %v816
        %1624 = vmatprep.subr.bf16.mxu0 %v829
        %1625 = vmatpush1.bf16.msra.mxu0 %v828
        %1626 = vmatprep.subr.bf16.mxu0 %v841
        %1627 = vmatpush1.bf16.msra.mxu0 %v840
        %1628 = vmatprep.subr.bf16.mxu0 %v853
        %1629 = vmatpush1.bf16.msra.mxu0 %v852
        %1630 = vmatprep.subr.bf16.mxu0 %v865
        %1631 = vmatpush1.bf16.msra.mxu0 %v864
        %1632 = vmatprep.subr.bf16.mxu0 %v877
        %1633 = vmatpush1.bf16.msra.mxu0 %v876
        %1634 = vmatprep.subr.bf16.mxu0 %v889
        %1635 = vmatpush1.bf16.msra.mxu0 %v888
        %1636 = vmatprep.subr.bf16.mxu0 %v901
        %1637 = vmatpush1.bf16.msra.mxu0 %v900
        %1638 = vmatprep.subr.bf16.mxu0 %v913
        %1639 = vmatpush1.bf16.msra.mxu0 %v912
        %1640 = vmatprep.subr.bf16.mxu0 %v925
        %1641 = vmatpush1.bf16.msra.mxu0 %v924
        %1642 = vmatprep.subr.bf16.mxu0 %v937
        %1643 = vmatpush1.bf16.msra.mxu0 %v936
        %1644 = vmatprep.subr.bf16.mxu0 %v949
        %1645 = vmatpush1.bf16.msra.mxu0 %v948
        %1646 = vmatprep.subr.bf16.mxu0 %v961
        %1647 = vmatpush1.bf16.msra.mxu0 %v960
        %1648 = vmatprep.subr.bf16.mxu0 %v973
        %1649 = vmatpush1.bf16.msra.mxu0 %v972
        %1650 = vmatprep.mubr.bf16.mxu0 %v1205
        %1651 = vmatmul.mubr.bf16.gmra.mrb[0].mxu0 %v1204
        %v1652 = vpop.f32.mrb[0].mxu0
        %v1653 = vadd.f32 %v1612, %v1652
        %v1654 = vpop.f32.mrb[0].mxu0
        %v1655 = vadd.f32 %v1614, %v1654
        %v1656 = vpop.f32.mrb[0].mxu0
        %v1657 = vpop.f32.mrb[0].mxu0
        %1658 = vdwg.mxu0
        %1659 = vmatprep.subr.bf16.mxu0 %v985
        %1660 = vmatpush1.bf16.msra.mxu0 %v984
        %1661 = vmatprep.subr.bf16.mxu0 %v997
        %1662 = vmatpush1.bf16.msra.mxu0 %v996
        %1663 = vmatprep.subr.bf16.mxu0 %v1009
        %1664 = vmatpush1.bf16.msra.mxu0 %v1008
        %1665 = vmatprep.subr.bf16.mxu0 %v1021
        %1666 = vmatpush1.bf16.msra.mxu0 %v1020
        %1667 = vmatprep.subr.bf16.mxu0 %v1033
        %1668 = vmatpush1.bf16.msra.mxu0 %v1032
        %1669 = vmatprep.subr.bf16.mxu0 %v1045
        %1670 = vmatpush1.bf16.msra.mxu0 %v1044
        %1671 = vmatprep.subr.bf16.mxu0 %v1057
        %1672 = vmatpush1.bf16.msra.mxu0 %v1056
        %1673 = vmatprep.subr.bf16.mxu0 %v1069
        %1674 = vmatpush1.bf16.msra.mxu0 %v1068
        %1675 = vmatprep.subr.bf16.mxu0 %v1081
        %1676 = vmatpush1.bf16.msra.mxu0 %v1080
        %1677 = vmatprep.subr.bf16.mxu0 %v1093
        %1678 = vmatpush1.bf16.msra.mxu0 %v1092
        %1679 = vmatprep.subr.bf16.mxu0 %v1105
        %1680 = vmatpush1.bf16.msra.mxu0 %v1104
        %1681 = vmatprep.subr.bf16.mxu0 %v1117
        %1682 = vmatpush1.bf16.msra.mxu0 %v1116
        %1683 = vmatprep.subr.bf16.mxu0 %v1129
        %1684 = vmatpush1.bf16.msra.mxu0 %v1128
        %1685 = vmatprep.subr.bf16.mxu0 %v1141
        %1686 = vmatpush1.bf16.msra.mxu0 %v1140
        %1687 = vmatprep.subr.bf16.mxu0 %v1153
        %1688 = vmatpush1.bf16.msra.mxu0 %v1152
        %1689 = vmatprep.subr.bf16.mxu0 %v1165
        %1690 = vmatpush1.bf16.msra.mxu0 %v1164
        %1691 = vmatprep.mubr.bf16.mxu0 %v1207
        %1692 = vmatmul.mubr.bf16.gmra.mrb[0].mxu0 %v1206
        %v1693 = vpop.f32.mrb[0].mxu0
        %v1694 = vadd.f32 %v1653, %v1693
        %v1695 = vpop.f32.mrb[0].mxu0
        %v1696 = vadd.f32 %v1655, %v1695
        %v1697 = vpop.f32.mrb[0].mxu0
        %v1698 = vpop.f32.mrb[0].mxu0
        %1699 = vdwg.mxu0
        %1700 = vmatprep.subr.bf16.mxu0 %v603
        %1701 = vmatpush1.bf16.msra.mxu0 %v602
        %1702 = vmatprep.subr.bf16.mxu0 %v615
        %1703 = vmatpush1.bf16.msra.mxu0 %v614
        %1704 = vmatprep.subr.bf16.mxu0 %v627
        %1705 = vmatpush1.bf16.msra.mxu0 %v626
        %1706 = vmatprep.subr.bf16.mxu0 %v639
        %1707 = vmatpush1.bf16.msra.mxu0 %v638
        %1708 = vmatprep.subr.bf16.mxu0 %v651
        %1709 = vmatpush1.bf16.msra.mxu0 %v650
        %1710 = vmatprep.subr.bf16.mxu0 %v663
        %1711 = vmatpush1.bf16.msra.mxu0 %v662
        %1712 = vmatprep.subr.bf16.mxu0 %v675
        %1713 = vmatpush1.bf16.msra.mxu0 %v674
        %1714 = vmatprep.subr.bf16.mxu0 %v687
        %1715 = vmatpush1.bf16.msra.mxu0 %v686
        %1716 = vmatprep.subr.bf16.mxu0 %v699
        %1717 = vmatpush1.bf16.msra.mxu0 %v698
        %1718 = vmatprep.subr.bf16.mxu0 %v711
        %1719 = vmatpush1.bf16.msra.mxu0 %v710
        %1720 = vmatprep.subr.bf16.mxu0 %v723
        %1721 = vmatpush1.bf16.msra.mxu0 %v722
        %1722 = vmatprep.subr.bf16.mxu0 %v735
        %1723 = vmatpush1.bf16.msra.mxu0 %v734
        %1724 = vmatprep.subr.bf16.mxu0 %v747
        %1725 = vmatpush1.bf16.msra.mxu0 %v746
        %1726 = vmatprep.subr.bf16.mxu0 %v759
        %1727 = vmatpush1.bf16.msra.mxu0 %v758
        %1728 = vmatprep.subr.bf16.mxu0 %v771
        %1729 = vmatpush1.bf16.msra.mxu0 %v770
        %1730 = vmatprep.subr.bf16.mxu0 %v783
        %1731 = vmatpush1.bf16.msra.mxu0 %v782
        %1732 = vmatprep.mubr.bf16.mxu0 %v1203
        %1733 = vmatmul.mubr.bf16.gmra.mrb[0].mxu0 %v1202
        %v1734 = vpop.f32.mrb[0].mxu0
        %v1735 = vadd.f32 0.0, %v1734
        %v1736 = vpop.f32.mrb[0].mxu0
        %v1737 = vadd.f32 0.0, %v1736
        %v1738 = vpop.f32.mrb[0].mxu0
        %v1739 = vpop.f32.mrb[0].mxu0
        %1740 = vdwg.mxu0
        %1741 = vmatprep.subr.bf16.mxu0 %v795
        %1742 = vmatpush1.bf16.msra.mxu0 %v794
        %1743 = vmatprep.subr.bf16.mxu0 %v807
        %1744 = vmatpush1.bf16.msra.mxu0 %v806
        %1745 = vmatprep.subr.bf16.mxu0 %v819
        %1746 = vmatpush1.bf16.msra.mxu0 %v818
        %1747 = vmatprep.subr.bf16.mxu0 %v831
        %1748 = vmatpush1.bf16.msra.mxu0 %v830
        %1749 = vmatprep.subr.bf16.mxu0 %v843
        %1750 = vmatpush1.bf16.msra.mxu0 %v842
        %1751 = vmatprep.subr.bf16.mxu0 %v855
        %1752 = vmatpush1.bf16.msra.mxu0 %v854
        %1753 = vmatprep.subr.bf16.mxu0 %v867
        %1754 = vmatpush1.bf16.msra.mxu0 %v866
        %1755 = vmatprep.subr.bf16.mxu0 %v879
        %1756 = vmatpush1.bf16.msra.mxu0 %v878
        %1757 = vmatprep.subr.bf16.mxu0 %v891
        %1758 = vmatpush1.bf16.msra.mxu0 %v890
        %1759 = vmatprep.subr.bf16.mxu0 %v903
        %1760 = vmatpush1.bf16.msra.mxu0 %v902
        %1761 = vmatprep.subr.bf16.mxu0 %v915
        %1762 = vmatpush1.bf16.msra.mxu0 %v914
        %1763 = vmatprep.subr.bf16.mxu0 %v927
        %1764 = vmatpush1.bf16.msra.mxu0 %v926
        %1765 = vmatprep.subr.bf16.mxu0 %v939
        %1766 = vmatpush1.bf16.msra.mxu0 %v938
        %1767 = vmatprep.subr.bf16.mxu0 %v951
        %1768 = vmatpush1.bf16.msra.mxu0 %v950
        %1769 = vmatprep.subr.bf16.mxu0 %v963
        %1770 = vmatpush1.bf16.msra.mxu0 %v962
        %1771 = vmatprep.subr.bf16.mxu0 %v975
        %1772 = vmatpush1.bf16.msra.mxu0 %v974
        %1773 = vmatprep.mubr.bf16.mxu0 %v1205
        %1774 = vmatmul.mubr.bf16.gmra.mrb[0].mxu0 %v1204
        %v1775 = vpop.f32.mrb[0].mxu0
        %v1776 = vadd.f32 %v1735, %v1775
        %v1777 = vpop.f32.mrb[0].mxu0
        %v1778 = vadd.f32 %v1737, %v1777
        %v1779 = vpop.f32.mrb[0].mxu0
        %v1780 = vpop.f32.mrb[0].mxu0
        %1781 = vdwg.mxu0
        %1782 = vmatprep.subr.bf16.mxu0 %v987
        %1783 = vmatpush1.bf16.msra.mxu0 %v986
        %1784 = vmatprep.subr.bf16.mxu0 %v999
        %1785 = vmatpush1.bf16.msra.mxu0 %v998
        %1786 = vmatprep.subr.bf16.mxu0 %v1011
        %1787 = vmatpush1.bf16.msra.mxu0 %v1010
        %1788 = vmatprep.subr.bf16.mxu0 %v1023
        %1789 = vmatpush1.bf16.msra.mxu0 %v1022
        %1790 = vmatprep.subr.bf16.mxu0 %v1035
        %1791 = vmatpush1.bf16.msra.mxu0 %v1034
        %1792 = vmatprep.subr.bf16.mxu0 %v1047
        %1793 = vmatpush1.bf16.msra.mxu0 %v1046
        %1794 = vmatprep.subr.bf16.mxu0 %v1059
        %1795 = vmatpush1.bf16.msra.mxu0 %v1058
        %1796 = vmatprep.subr.bf16.mxu0 %v1071
        %1797 = vmatpush1.bf16.msra.mxu0 %v1070
        %1798 = vmatprep.subr.bf16.mxu0 %v1083
        %1799 = vmatpush1.bf16.msra.mxu0 %v1082
        %1800 = vmatprep.subr.bf16.mxu0 %v1095
        %1801 = vmatpush1.bf16.msra.mxu0 %v1094
        %1802 = vmatprep.subr.bf16.mxu0 %v1107
        %1803 = vmatpush1.bf16.msra.mxu0 %v1106
        %1804 = vmatprep.subr.bf16.mxu0 %v1119
        %1805 = vmatpush1.bf16.msra.mxu0 %v1118
        %1806 = vmatprep.subr.bf16.mxu0 %v1131
        %1807 = vmatpush1.bf16.msra.mxu0 %v1130
        %1808 = vmatprep.subr.bf16.mxu0 %v1143
        %1809 = vmatpush1.bf16.msra.mxu0 %v1142
        %1810 = vmatprep.subr.bf16.mxu0 %v1155
        %1811 = vmatpush1.bf16.msra.mxu0 %v1154
        %1812 = vmatprep.subr.bf16.mxu0 %v1167
        %1813 = vmatpush1.bf16.msra.mxu0 %v1166
        %1814 = vmatprep.mubr.bf16.mxu0 %v1207
        %1815 = vmatmul.mubr.bf16.gmra.mrb[0].mxu0 %v1206
        %v1816 = vpop.f32.mrb[0].mxu0
        %v1817 = vadd.f32 %v1776, %v1816
        %v1818 = vpop.f32.mrb[0].mxu0
        %v1819 = vadd.f32 %v1778, %v1818
        %v1820 = vpop.f32.mrb[0].mxu0
        %v1821 = vpop.f32.mrb[0].mxu0
        %1822 = vdwg.mxu0
        %1823 = vmatprep.subr.bf16.mxu0 %v605
        %1824 = vmatpush1.bf16.msra.mxu0 %v604
        %1825 = vmatprep.subr.bf16.mxu0 %v617
        %1826 = vmatpush1.bf16.msra.mxu0 %v616
        %1827 = vmatprep.subr.bf16.mxu0 %v629
        %1828 = vmatpush1.bf16.msra.mxu0 %v628
        %1829 = vmatprep.subr.bf16.mxu0 %v641
        %1830 = vmatpush1.bf16.msra.mxu0 %v640
        %1831 = vmatprep.subr.bf16.mxu0 %v653
        %1832 = vmatpush1.bf16.msra.mxu0 %v652
        %1833 = vmatprep.subr.bf16.mxu0 %v665
        %1834 = vmatpush1.bf16.msra.mxu0 %v664
        %1835 = vmatprep.subr.bf16.mxu0 %v677
        %1836 = vmatpush1.bf16.msra.mxu0 %v676
        %1837 = vmatprep.subr.bf16.mxu0 %v689
        %1838 = vmatpush1.bf16.msra.mxu0 %v688
        %1839 = vmatprep.subr.bf16.mxu0 %v701
        %1840 = vmatpush1.bf16.msra.mxu0 %v700
        %1841 = vmatprep.subr.bf16.mxu0 %v713
        %1842 = vmatpush1.bf16.msra.mxu0 %v712
        %1843 = vmatprep.subr.bf16.mxu0 %v725
        %1844 = vmatpush1.bf16.msra.mxu0 %v724
        %1845 = vmatprep.subr.bf16.mxu0 %v737
        %1846 = vmatpush1.bf16.msra.mxu0 %v736
        %1847 = vmatprep.subr.bf16.mxu0 %v749
        %1848 = vmatpush1.bf16.msra.mxu0 %v748
        %1849 = vmatprep.subr.bf16.mxu0 %v761
        %1850 = vmatpush1.bf16.msra.mxu0 %v760
        %1851 = vmatprep.subr.bf16.mxu0 %v773
        %1852 = vmatpush1.bf16.msra.mxu0 %v772
        %1853 = vmatprep.subr.bf16.mxu0 %v785
        %1854 = vmatpush1.bf16.msra.mxu0 %v784
        %1855 = vmatprep.mubr.bf16.mxu0 %v1203
        %1856 = vmatmul.mubr.bf16.gmra.mrb[0].mxu0 %v1202
        %v1857 = vpop.f32.mrb[0].mxu0
        %v1858 = vadd.f32 0.0, %v1857
        %v1859 = vpop.f32.mrb[0].mxu0
        %v1860 = vadd.f32 0.0, %v1859
        %v1861 = vpop.f32.mrb[0].mxu0
        %v1862 = vpop.f32.mrb[0].mxu0
        %1863 = vdwg.mxu0
        %1864 = vmatprep.subr.bf16.mxu0 %v797
        %1865 = vmatpush1.bf16.msra.mxu0 %v796
        %1866 = vmatprep.subr.bf16.mxu0 %v809
        %1867 = vmatpush1.bf16.msra.mxu0 %v808
        %1868 = vmatprep.subr.bf16.mxu0 %v821
        %1869 = vmatpush1.bf16.msra.mxu0 %v820
        %1870 = vmatprep.subr.bf16.mxu0 %v833
        %1871 = vmatpush1.bf16.msra.mxu0 %v832
        %1872 = vmatprep.subr.bf16.mxu0 %v845
        %1873 = vmatpush1.bf16.msra.mxu0 %v844
        %1874 = vmatprep.subr.bf16.mxu0 %v857
        %1875 = vmatpush1.bf16.msra.mxu0 %v856
        %1876 = vmatprep.subr.bf16.mxu0 %v869
        %1877 = vmatpush1.bf16.msra.mxu0 %v868
        %1878 = vmatprep.subr.bf16.mxu0 %v881
        %1879 = vmatpush1.bf16.msra.mxu0 %v880
        %1880 = vmatprep.subr.bf16.mxu0 %v893
        %1881 = vmatpush1.bf16.msra.mxu0 %v892
        %1882 = vmatprep.subr.bf16.mxu0 %v905
        %1883 = vmatpush1.bf16.msra.mxu0 %v904
        %1884 = vmatprep.subr.bf16.mxu0 %v917
        %1885 = vmatpush1.bf16.msra.mxu0 %v916
        %1886 = vmatprep.subr.bf16.mxu0 %v929
        %1887 = vmatpush1.bf16.msra.mxu0 %v928
        %1888 = vmatprep.subr.bf16.mxu0 %v941
        %1889 = vmatpush1.bf16.msra.mxu0 %v940
        %1890 = vmatprep.subr.bf16.mxu0 %v953
        %1891 = vmatpush1.bf16.msra.mxu0 %v952
        %1892 = vmatprep.subr.bf16.mxu0 %v965
        %1893 = vmatpush1.bf16.msra.mxu0 %v964
        %1894 = vmatprep.subr.bf16.mxu0 %v977
        %1895 = vmatpush1.bf16.msra.mxu0 %v976
        %1896 = vmatprep.mubr.bf16.mxu0 %v1205
        %1897 = vmatmul.mubr.bf16.gmra.mrb[0].mxu0 %v1204
        %v1898 = vpop.f32.mrb[0].mxu0
        %v1899 = vadd.f32 %v1858, %v1898
        %v1900 = vpop.f32.mrb[0].mxu0
        %v1901 = vadd.f32 %v1860, %v1900
        %v1902 = vpop.f32.mrb[0].mxu0
        %v1903 = vpop.f32.mrb[0].mxu0
        %1904 = vdwg.mxu0
        %1905 = vmatprep.subr.bf16.mxu0 %v989
        %1906 = vmatpush1.bf16.msra.mxu0 %v988
        %1907 = vmatprep.subr.bf16.mxu0 %v1001
        %1908 = vmatpush1.bf16.msra.mxu0 %v1000
        %1909 = vmatprep.subr.bf16.mxu0 %v1013
        %1910 = vmatpush1.bf16.msra.mxu0 %v1012
        %1911 = vmatprep.subr.bf16.mxu0 %v1025
        %1912 = vmatpush1.bf16.msra.mxu0 %v1024
        %1913 = vmatprep.subr.bf16.mxu0 %v1037
        %1914 = vmatpush1.bf16.msra.mxu0 %v1036
        %1915 = vmatprep.subr.bf16.mxu0 %v1049
        %1916 = vmatpush1.bf16.msra.mxu0 %v1048
        %1917 = vmatprep.subr.bf16.mxu0 %v1061
        %1918 = vmatpush1.bf16.msra.mxu0 %v1060
        %1919 = vmatprep.subr.bf16.mxu0 %v1073
        %1920 = vmatpush1.bf16.msra.mxu0 %v1072
        %1921 = vmatprep.subr.bf16.mxu0 %v1085
        %1922 = vmatpush1.bf16.msra.mxu0 %v1084
        %1923 = vmatprep.subr.bf16.mxu0 %v1097
        %1924 = vmatpush1.bf16.msra.mxu0 %v1096
        %1925 = vmatprep.subr.bf16.mxu0 %v1109
        %1926 = vmatpush1.bf16.msra.mxu0 %v1108
        %1927 = vmatprep.subr.bf16.mxu0 %v1121
        %1928 = vmatpush1.bf16.msra.mxu0 %v1120
        %1929 = vmatprep.subr.bf16.mxu0 %v1133
        %1930 = vmatpush1.bf16.msra.mxu0 %v1132
        %1931 = vmatprep.subr.bf16.mxu0 %v1145
        %1932 = vmatpush1.bf16.msra.mxu0 %v1144
        %1933 = vmatprep.subr.bf16.mxu0 %v1157
        %1934 = vmatpush1.bf16.msra.mxu0 %v1156
        %1935 = vmatprep.subr.bf16.mxu0 %v1169
        %1936 = vmatpush1.bf16.msra.mxu0 %v1168
        %1937 = vmatprep.mubr.bf16.mxu0 %v1207
        %1938 = vmatmul.mubr.bf16.gmra.mrb[0].mxu0 %v1206
        %v1939 = vpop.f32.mrb[0].mxu0
        %v1940 = vadd.f32 %v1899, %v1939
        %v1941 = vpop.f32.mrb[0].mxu0
        %v1942 = vadd.f32 %v1901, %v1941
        %v1943 = vpop.f32.mrb[0].mxu0
        %v1944 = vpop.f32.mrb[0].mxu0
        %1945 = vdwg.mxu0
        %v1946 = vld [vmem:[%s258] sm:$0xff]
        %v1947 = vld [vmem:[%s258 + $0x8] sm:$0xf]
        %v1950 = vlaneseq
        %v1951 = vshrl.u32 %v1950, 7
        %v1952 = vsub.s32 0, %v1951
        %v1953 = vrot.slane %v1946, %v1952
        %v1954 = vlaneseq
        %v1955 = vshrl.u32 %v1954, 7
        %v1956 = vsub.s32 1, %v1955
        %v1957 = vrot.slane %v1946, %v1956
        %v1958 = vlaneseq
        %v1959 = vshrl.u32 %v1958, 7
        %v1960 = vsub.s32 2, %v1959
        %v1961 = vrot.slane %v1946, %v1960
        %v1962 = vlaneseq
        %v1963 = vshrl.u32 %v1962, 7
        %v1964 = vsub.s32 3, %v1963
        %v1965 = vrot.slane %v1946, %v1964
        %v1966 = vlaneseq
        %v1967 = vshrl.u32 %v1966, 7
        %v1968 = vsub.s32 4, %v1967
        %v1969 = vrot.slane %v1946, %v1968
        %v1970 = vlaneseq
        %v1971 = vshrl.u32 %v1970, 7
        %v1972 = vsub.s32 5, %v1971
        %v1973 = vrot.slane %v1946, %v1972
        %v1974 = vlaneseq
        %v1975 = vshrl.u32 %v1974, 7
        %v1976 = vsub.s32 6, %v1975
        %v1977 = vrot.slane %v1946, %v1976
        %v1978 = vlaneseq
        %v1979 = vshrl.u32 %v1978, 7
        %v1980 = vsub.s32 7, %v1979
        %v1981 = vrot.slane %v1946, %v1980
        %v1982 = vlaneseq
        %v1983 = vshrl.u32 %v1982, 7
        %v1984 = vsub.s32 0, %v1983
        %v1985 = vrot.slane %v1947, %v1984
        %v1986 = vlaneseq
        %v1987 = vshrl.u32 %v1986, 7
        %v1988 = vsub.s32 1, %v1987
        %v1989 = vrot.slane %v1947, %v1988
        %v1990 = vlaneseq
        %v1991 = vshrl.u32 %v1990, 7
        %v1992 = vsub.s32 2, %v1991
        %v1993 = vrot.slane %v1947, %v1992
        %v1994 = vlaneseq
        %v1995 = vshrl.u32 %v1994, 7
        %v1996 = vsub.s32 3, %v1995
        %v1997 = vrot.slane %v1947, %v1996
        %v2010 = vmul.f32 %v1325, %v1953
        %v2011 = vmul.f32 %v1327, %v1957
        %v2012 = vmul.f32 %v1448, %v1961
        %v2013 = vmul.f32 %v1450, %v1965
        %v2014 = vmul.f32 %v1571, %v1969
        %v2015 = vmul.f32 %v1573, %v1973
        %v2016 = vmul.f32 %v1694, %v1977
        %v2017 = vmul.f32 %v1696, %v1981
        %v2018 = vmul.f32 %v1817, %v1985
        %v2019 = vmul.f32 %v1819, %v1989
        %v2020 = vmul.f32 %v1940, %v1993
        %v2021 = vmul.f32 %v1942, %v1997
        %v2022 = vld [vmem:[%s267] sm:$0xff]
        %v2023 = vld [vmem:[%s267 + $0x8] sm:$0xf]
        %v2026 = vlaneseq
        %v2027 = vshrl.u32 %v2026, 7
        %v2028 = vsub.s32 0, %v2027
        %v2029 = vrot.slane %v2022, %v2028
        %v2030 = vlaneseq
        %v2031 = vshrl.u32 %v2030, 7
        %v2032 = vsub.s32 1, %v2031
        %v2033 = vrot.slane %v2022, %v2032
        %v2034 = vlaneseq
        %v2035 = vshrl.u32 %v2034, 7
        %v2036 = vsub.s32 2, %v2035
        %v2037 = vrot.slane %v2022, %v2036
        %v2038 = vlaneseq
        %v2039 = vshrl.u32 %v2038, 7
        %v2040 = vsub.s32 3, %v2039
        %v2041 = vrot.slane %v2022, %v2040
        %v2042 = vlaneseq
        %v2043 = vshrl.u32 %v2042, 7
        %v2044 = vsub.s32 4, %v2043
        %v2045 = vrot.slane %v2022, %v2044
        %v2046 = vlaneseq
        %v2047 = vshrl.u32 %v2046, 7
        %v2048 = vsub.s32 5, %v2047
        %v2049 = vrot.slane %v2022, %v2048
        %v2050 = vlaneseq
        %v2051 = vshrl.u32 %v2050, 7
        %v2052 = vsub.s32 6, %v2051
        %v2053 = vrot.slane %v2022, %v2052
        %v2054 = vlaneseq
        %v2055 = vshrl.u32 %v2054, 7
        %v2056 = vsub.s32 7, %v2055
        %v2057 = vrot.slane %v2022, %v2056
        %v2058 = vlaneseq
        %v2059 = vshrl.u32 %v2058, 7
        %v2060 = vsub.s32 0, %v2059
        %v2061 = vrot.slane %v2023, %v2060
        %v2062 = vlaneseq
        %v2063 = vshrl.u32 %v2062, 7
        %v2064 = vsub.s32 1, %v2063
        %v2065 = vrot.slane %v2023, %v2064
        %v2066 = vlaneseq
        %v2067 = vshrl.u32 %v2066, 7
        %v2068 = vsub.s32 2, %v2067
        %v2069 = vrot.slane %v2023, %v2068
        %v2070 = vlaneseq
        %v2071 = vshrl.u32 %v2070, 7
        %v2072 = vsub.s32 3, %v2071
        %v2073 = vrot.slane %v2023, %v2072
        %v2086 = vadd.f32 %v2010, %v2029
        %v2087 = vadd.f32 %v2011, %v2033
        %v2088 = vadd.f32 %v2012, %v2037
        %v2089 = vadd.f32 %v2013, %v2041
        %v2090 = vadd.f32 %v2014, %v2045
        %v2091 = vadd.f32 %v2015, %v2049
        %v2092 = vadd.f32 %v2016, %v2053
        %v2093 = vadd.f32 %v2017, %v2057
        %v2094 = vadd.f32 %v2018, %v2061
        %v2095 = vadd.f32 %v2019, %v2065
        %v2096 = vadd.f32 %v2020, %v2069
        %v2097 = vadd.f32 %v2021, %v2073
        %v2110 = vcombine.low %v2086, %v2087
        %v2111 = vcombine.low %v2088, %v2089
        %v2112 = vcombine.low %v2090, %v2091
        %v2113 = vcombine.low %v2092, %v2093
        %v2115 = vunpack.c.l.s4 1966171168
        %v2116 = vunpack.c.0.s8 %v2115
        %v2117 = vlaneseq
        %v2118 = vshrl.u32 %v2117, 7
        %v2119 = vsub.s32 %v2116, %v2118
        %v2120 = vrot.slane %v2110, %v2119
        %v2122 = vunpack.c.l.s4 1966171168
        %v2123 = vunpack.c.0.s8 %v2122
        %v2124 = vlaneseq
        %v2125 = vshrl.u32 %v2124, 7
        %v2126 = vsub.s32 %v2123, %v2125
        %v2127 = vrot.slane %v2111, %v2126
        %v2129 = vunpack.c.l.s4 1966171168
        %v2130 = vunpack.c.0.s8 %v2129
        %v2131 = vlaneseq
        %v2132 = vshrl.u32 %v2131, 7
        %v2133 = vsub.s32 %v2130, %v2132
        %v2134 = vrot.slane %v2112, %v2133
        %v2136 = vunpack.c.l.s4 1966171168
        %v2137 = vunpack.c.0.s8 %v2136
        %v2138 = vlaneseq
        %v2139 = vshrl.u32 %v2138, 7
        %v2140 = vsub.s32 %v2137, %v2139
        %v2141 = vrot.slane %v2113, %v2140
        %v2142 = vcombine.low %v2120, %v2127
        %v2143 = vcombine.low %v2134, %v2141
        %v2145 = vunpack.c.l.s4 1966171168
        %v2146 = vunpack.c.0.s8 %v2145
        %v2147 = vlaneseq
        %v2148 = vshrl.u32 %v2147, 7
        %v2149 = vsub.s32 %v2146, %v2148
        %v2150 = vrot.slane %v2142, %v2149
        %v2152 = vunpack.c.l.s4 1966171168
        %v2153 = vunpack.c.0.s8 %v2152
        %v2154 = vlaneseq
        %v2155 = vshrl.u32 %v2154, 7
        %v2156 = vsub.s32 %v2153, %v2155
        %v2157 = vrot.slane %v2143, %v2156
        %v2158 = vcombine.low %v2150, %v2157
        %v2159 = vcombine.low %v2094, %v2095
        %v2160 = vcombine.low %v2096, %v2097
        %v2162 = vunpack.c.l.s4 1966171168
        %v2163 = vunpack.c.0.s8 %v2162
        %v2164 = vlaneseq
        %v2165 = vshrl.u32 %v2164, 7
        %v2166 = vsub.s32 %v2163, %v2165
        %v2167 = vrot.slane %v2159, %v2166
        %v2169 = vunpack.c.l.s4 1966171168
        %v2170 = vunpack.c.0.s8 %v2169
        %v2171 = vlaneseq
        %v2172 = vshrl.u32 %v2171, 7
        %v2173 = vsub.s32 %v2170, %v2172
        %v2174 = vrot.slane %v2160, %v2173
        %v2175 = vcombine.low %v2167, %v2174
        %v2177 = vunpack.c.l.s4 1966171168
        %v2178 = vunpack.c.0.s8 %v2177
        %v2179 = vlaneseq
        %v2180 = vshrl.u32 %v2179, 7
        %v2181 = vsub.s32 %v2178, %v2180
        %v2182 = vrot.slane %v2175, %v2181
        %2185 = vst [vmem:[%s301] sm:$0xff] %v2158
        %v2186 = vlaneseq
        %vm2187 = vcmp.ge.s32.totalorder %v2186, 0
        %vm2188 = vcmp.lt.s32.totalorder %v2186, 512
        %vm2189 = vmand %vm2187, %vm2188
        %2190 = vst.msk [vmem:[%s301 + $0x8] sm:$0xf] %vm2189, %v2182
        %s2191 = sand.u32 %s132, 1
        %s2192 = scalar_lea.sflag [#allocation4], %s2191
        %s2193 = sand.u32 %s132, 1
        %s2194 = smul.addr %s2193, 12
        %s2195 = scalar_lea.vmem [#allocation10], %s2194
        // Predicated region
        $region53: #{tpu_custom_call.1} parent=35 // pred_check
          %p2196 = pneg %p142
        $region54: #{tpu_custom_call.1} parent=35 // pred_check_branch
          %2198 = sbr.rel (%p2196) target = $region56
        $region55: #{tpu_custom_call.1} parent=35 // pred_region
          %s2199 = smul.u32 12, %s25
          %s2201 = ssub.s32 192, 192
          %2202 = vsyncadd %s2192, %s2201
          %s2203 = smul.addr %s2199, 16
          %s2204 = scalar_lea.hbm %s4, %s2203
          %s2206 = sshll.u32 %s2195, 4
          %s2207 = int_to_ptr.vmem [resolvable:$true] %s2206
          %2209 = dma.vmem_to_hbm [thread:$0]  %s2207, 192, %s2204, %s2192
        $region56: #{tpu_custom_call.1} parent=35 // pred_fallthru
          _
      $region36: #{tpu_custom_call.1} parent=5 // pred_fallthru
        _
      %p2210 = scmp.le.s32.totalorder 2, %s20
      // Predicated region
      $region57: #{tpu_custom_call.1} parent=5 // pred_check
        %p2211 = pneg %p2210
      $region58: #{tpu_custom_call.1} parent=5 // pred_check_branch
        %2213 = sbr.rel (%p2211) target = $region60
      $region59: #{tpu_custom_call.1} parent=5 // pred_region
        %s2214 = ssub.s32 %s20, 2
        // Predicated region
        $region61: #{tpu_custom_call.1} parent=59 // pred_check
          %p2215 = pneg %p148
        $region62: #{tpu_custom_call.1} parent=59 // pred_check_branch
          %2217 = sbr.rel (%p2215) target = $region64
        $region63: #{tpu_custom_call.1} parent=59 // pred_region
          %s2218 = sand.u32 %s133, 1
          %s2219 = scalar_lea.sflag [#allocation4], %s2218
          %s2220 = sand.u32 %s133, 1
          %s2221 = smul.addr %s2220, 12
          %s2222 = scalar_lea.vmem [#allocation10], %s2221
          %2223 = dma.done %s2219, 192
        $region64: #{tpu_custom_call.1} parent=59 // pred_fallthru
          _
      $region60: #{tpu_custom_call.1} parent=5 // pred_fallthru
        _
    $region6: #{tpu_custom_call.1} parent=1 // loop_footer
      %s24 = sadd.s32 1, %s20
    $region7: #{tpu_custom_call.1} parent=1 // loop_footer_branch
      %19 = sbr.rel target = $region3
    $region8: #{tpu_custom_call.1} parent=1 // loop_exit
      _
    %2224 = vsyncpa [#allocation3], 1
    %s2225 = scalar_lea.sflag [#allocation3], 1
    %2226 = vsyncpa %s2225, 1
    %2227 = vsyncpa [#allocation6], 1
    %s2228 = scalar_lea.sflag [#allocation6], 1
    %2229 = vsyncpa %s2228, 1
    %2230 = vsyncpa [#allocation9], 1
    %s2231 = scalar_lea.sflag [#allocation9], 1
    %2232 = vsyncpa %s2231, 1
    %2233 = vsyncpa [#allocation4], 1
    %s2234 = scalar_lea.sflag [#allocation4], 1
    %2235 = vsyncpa %s2234, 1

</llo_original>
